<compile_context>
chip_gen: v7x
topology: tpu7x:2x2x1
jax: 0.10.0
libtpu: 0.0.40
codegen_flags: <defaults>
</compile_context>

<pallas_src>
import math

import jax
import jax.numpy as jnp
from jax.experimental import pallas as pl

# ---- small synthetic DistilBERT config ------------------------------------
VOCAB = 50
MAX_POS = 32
BATCH = 2
SEQ = 8
DIM = 64
N_HEADS = 4
HEAD_DIM = DIM // N_HEADS
FFN = 128
N_LAYERS = 2
NUM_CLASSES = 3
CLS_PAD = 128          # classifier logits padded to full lane width (lane-dense stores)
LN_EPS = 1e-12
MASK_BIAS = -1e9       # finite additive mask sentinel (safer than finfo.min)


# ---- in-kernel helpers -----------------------------------------------------
def _layernorm(x, gamma, beta):
    mu = jnp.mean(x, axis=-1, keepdims=True)
    xc = x - mu
    var = jnp.mean(xc * xc, axis=-1, keepdims=True)
    return xc * jax.lax.rsqrt(var + LN_EPS) * gamma + beta


def _softmax_lastdim(scores):
    # hand-rolled softmax; reciprocal goes to the EUP slot
    m = jnp.max(scores, axis=-1, keepdims=True)
    e = jnp.exp(scores - m)
    return e * pl.reciprocal(jnp.sum(e, axis=-1, keepdims=True), approx=True)


# ---- fused forward kernel (single invocation, no grid) ---------------------
def fused_forward_kernel(
    x_ref, bias_ref, embln_ref,
    wqkv_ref, bqkv_ref, wo_ref, w1_ref, b1_ref, w2_ref, vecs_ref,
    wp_ref, bp_ref, wc_ref, bc_ref,
    out_ref,
):
    b, s, d = x_ref.shape
    bs = b * s
    n_layers = wqkv_ref.shape[0]
    n_heads = N_HEADS
    hd = d // n_heads

    # ---- embeddings LayerNorm ----
    embln = embln_ref[...]                                   # (2, D): [gamma; beta]
    x2 = x_ref[...].reshape(bs, d)
    h = _layernorm(x2, embln[0:1, :], embln[1:2, :])         # (BS, D) f32 residual stream

    bias = bias_ref[...]                                     # (BS, BS) additive mask

    # ---- transformer blocks, Python-unrolled (weights fully VMEM-resident) ----
    for layer in range(n_layers):
        vecs = vecs_ref[layer]                               # (6, D)
        bo, sa_g, sa_b = vecs[0:1, :], vecs[1:2, :], vecs[2:3, :]
        b2, ff_g, ff_b = vecs[3:4, :], vecs[4:5, :], vecs[5:6, :]

        # fused QKV projection: one lane-dense (BS, D) x (D, 3D) MXU pass
        qkv = jnp.dot(h.astype(jnp.bfloat16), wqkv_ref[layer],
                      preferred_element_type=jnp.float32) + bqkv_ref[layer]
        # 1/sqrt(head_dim) already folded into W_q / b_q at init (NOT applied here).

        # per-head attention via static lane slices (heads = contiguous hd-blocks)
        ctx_parts = []
        for hh in range(n_heads):
            lo = hh * hd
            qh = qkv[:, lo:lo + hd].astype(jnp.bfloat16)
            kh = qkv[:, d + lo:d + lo + hd].astype(jnp.bfloat16)
            vh = qkv[:, 2 * d + lo:2 * d + lo + hd].astype(jnp.bfloat16)
            # q @ k^T via dot_general (contract last dims) — no explicit transpose
            sc = jax.lax.dot_general(qh, kh, (((1,), (1,)), ((), ())),
                                     preferred_element_type=jnp.float32)
            p = _softmax_lastdim(sc + bias).astype(jnp.bfloat16)
            ctx_parts.append(jnp.dot(p, vh, preferred_element_type=jnp.float32))
        ctx = jnp.concatenate(ctx_parts, axis=-1)            # (BS, D)

        # output projection: ONE K=D MXU pass (no per-head accumulate chain)
        attn = jnp.dot(ctx.astype(jnp.bfloat16), wo_ref[layer],
                       preferred_element_type=jnp.float32) + bo
        h1 = _layernorm(attn + h, sa_g, sa_b)

        # FFN
        ff = jnp.dot(h1.astype(jnp.bfloat16), w1_ref[layer],
                     preferred_element_type=jnp.float32) + b1_ref[layer]
        # TODO(synk): HF DistilBERT uses exact erf-GELU; tanh-approximate GELU used here.
        ff = jax.nn.gelu(ff, approximate=True)
        ff = jnp.dot(ff.astype(jnp.bfloat16), w2_ref[layer],
                     preferred_element_type=jnp.float32) + b2
        h = _layernorm(ff + h1, ff_g, ff_b)

    # ---- classifier head on CLS rows only -> lane-dense (B, CLS_PAD) output ----
    cls = jnp.concatenate([h[i * s:i * s + 1, :] for i in range(b)], axis=0)  # (B, D)
    z = jnp.dot(cls.astype(jnp.bfloat16), wp_ref[...],
                preferred_element_type=jnp.float32) + bp_ref[...]
    z = jnp.maximum(z, 0.0)                                  # ReLU
    out_ref[...] = jnp.dot(z.astype(jnp.bfloat16), wc_ref[...],
                           preferred_element_type=jnp.float32) + bc_ref[...]


# ---- wrapper ----------------------------------------------------------------
def distilbert_forward(params, input_ids, attention_mask=None):
    b, s = input_ids.shape
    bs = b * s
    if attention_mask is None:
        attention_mask = jnp.ones((b, s), jnp.float32)

    # plain-JAX glue: embedding gather + additive fused-attention bias
    tok = jnp.take(params["word_emb"], input_ids, axis=0)          # (B, S, D)
    pos = params["pos_emb"][:s][None, :, :]                        # (1, S, D)
    x = (tok + pos).astype(jnp.float32)

    seq_id = jnp.repeat(jnp.arange(b, dtype=jnp.int32), s)         # (BS,)
    same_seq = seq_id[:, None] == seq_id[None, :]                  # block-diagonal
    key_ok = attention_mask.reshape(bs) > 0.5                      # key is not padding
    bias = jnp.where(same_seq & key_ok[None, :], 0.0, MASK_BIAS).astype(jnp.float32)

    out = pl.pallas_call(
        fused_forward_kernel,
        out_shape=jax.ShapeDtypeStruct((b, CLS_PAD), jnp.float32),
        # gridless: every operand is a whole-array VMEM block; total footprint ~ a few
        # hundred KB, far under VMEM on v5e/v6e/v7x.
    )(x, bias, params["emb_ln"],
      params["wqkv"], params["bqkv"], params["wo"],
      params["w1"], params["b1"], params["w2"], params["vecs"],
      params["wp"], params["bp"], params["wc"], params["bc"])

    # contiguous slice of the real class columns (CLS rows already selected in-kernel)
    return out[:, :NUM_CLASSES]


# ---- parameters (deterministic synthetic init) -----------------------------
def init_params(key):
    keys = jax.random.split(key, 8 + 6 * N_LAYERS)
    it = iter(keys)

    def nrm(shape, scale=0.02):
        return scale * jax.random.normal(next(it), shape, dtype=jnp.float32)

    inv_sqrt_hd = 1.0 / math.sqrt(HEAD_DIM)

    wqkv, bqkv, wo, w1, b1, w2, vecs = [], [], [], [], [], [], []
    for _ in range(N_LAYERS):
        wq = nrm((DIM, DIM)) * inv_sqrt_hd                  # 1/sqrt(hd) folded into W_q ...
        wk = nrm((DIM, DIM))
        wv = nrm((DIM, DIM))
        bq = jnp.zeros((DIM,), jnp.float32) * inv_sqrt_hd   # ... and b_q (init-time only)
        bk = jnp.zeros((DIM,), jnp.float32)
        bv = jnp.zeros((DIM,), jnp.float32)

        wqkv.append(jnp.concatenate([wq, wk, wv], axis=1))      # (D, 3D)  [q | k | v]
        bqkv.append(jnp.concatenate([bq, bk, bv])[None, :])     # (1, 3D)
        wo.append(nrm((DIM, DIM)))                              # (D, D)
        w1.append(nrm((DIM, FFN)))
        b1.append(jnp.zeros((1, FFN), jnp.float32))
        w2.append(nrm((FFN, DIM)))
        vecs.append(jnp.stack([
            jnp.zeros((DIM,), jnp.float32),   # b_o
            jnp.ones((DIM,), jnp.float32),    # sa_layernorm gamma
            jnp.zeros((DIM,), jnp.float32),   # sa_layernorm beta
            jnp.zeros((DIM,), jnp.float32),   # b_2
            jnp.ones((DIM,), jnp.float32),    # ffn_layernorm gamma
            jnp.zeros((DIM,), jnp.float32),   # ffn_layernorm beta
        ]))

    wc = jnp.pad(nrm((DIM, NUM_CLASSES)), ((0, 0), (0, CLS_PAD - NUM_CLASSES)))

    return {
        "word_emb": nrm((VOCAB, DIM)),
        "pos_emb": nrm((MAX_POS, DIM)),
        "emb_ln": jnp.concatenate([jnp.ones((1, DIM), jnp.float32),
                                   jnp.zeros((1, DIM), jnp.float32)], axis=0),
        "wqkv": jnp.stack(wqkv).astype(jnp.bfloat16),   # (L, D, 3D)
        "bqkv": jnp.stack(bqkv).astype(jnp.float32),    # (L, 1, 3D)
        "wo":   jnp.stack(wo).astype(jnp.bfloat16),     # (L, D, D)
        "w1":   jnp.stack(w1).astype(jnp.bfloat16),     # (L, D, FFN)
        "b1":   jnp.stack(b1).astype(jnp.float32),      # (L, 1, FFN)
        "w2":   jnp.stack(w2).astype(jnp.bfloat16),     # (L, FFN, D)
        "vecs": jnp.stack(vecs).astype(jnp.float32),    # (L, 6, D)
        "wp": nrm((DIM, DIM)).astype(jnp.bfloat16),
        "bp": jnp.zeros((1, DIM), jnp.float32),
        "wc": wc.astype(jnp.bfloat16),                  # (D, 128); only first 3 cols real
        "bc": jnp.zeros((1, CLS_PAD), jnp.float32),
    }


if __name__ == "__main__":
    key = jax.random.PRNGKey(0)
    pkey, dkey = jax.random.split(key)
    params = init_params(pkey)

    input_ids = jax.random.randint(dkey, (BATCH, SEQ), 0, VOCAB, dtype=jnp.int32)
    # second sequence has 2 padding positions to exercise attention masking
    attention_mask = jnp.array(
        [[1] * SEQ, [1] * (SEQ - 2) + [0, 0]], dtype=jnp.float32)

    logits = jax.jit(distilbert_forward)(params, input_ids, attention_mask)
    jax.block_until_ready(logits)
    assert logits.shape == (BATCH, NUM_CLASSES)
    assert bool(jnp.all(jnp.isfinite(logits)))
    print("KERNEL_OK")
</pallas_src>

<mosaic_0001>
module attributes {stable_mosaic.version = 11 : i64} {
  func.func @fused_forward_kernel(%arg0: memref<2x8x64xf32, #tpu.memory_space<vmem>>, %arg1: memref<16x16xf32, #tpu.memory_space<vmem>>, %arg2: memref<2x64xf32, #tpu.memory_space<vmem>>, %arg3: memref<2x64x192xbf16, #tpu.memory_space<vmem>>, %arg4: memref<2x1x192xf32, #tpu.memory_space<vmem>>, %arg5: memref<2x64x64xbf16, #tpu.memory_space<vmem>>, %arg6: memref<2x64x128xbf16, #tpu.memory_space<vmem>>, %arg7: memref<2x1x128xf32, #tpu.memory_space<vmem>>, %arg8: memref<2x128x64xbf16, #tpu.memory_space<vmem>>, %arg9: memref<2x6x64xf32, #tpu.memory_space<vmem>>, %arg10: memref<64x64xbf16, #tpu.memory_space<vmem>>, %arg11: memref<1x64xf32, #tpu.memory_space<vmem>>, %arg12: memref<64x128xbf16, #tpu.memory_space<vmem>>, %arg13: memref<1x128xf32, #tpu.memory_space<vmem>>, %arg14: memref<2x128xf32, #tpu.memory_space<vmem>>) attributes {dimension_semantics = [], scalar_prefetch = 0 : i64, scratch_operands = 0 : i64, tpu.core_type = #tpu.core_type<tc>} {
    %c0 = arith.constant 0 : index
    %c0_0 = arith.constant 0 : index
    %0 = vector.load %arg2[%c0, %c0_0] : memref<2x64xf32, #tpu.memory_space<vmem>>, vector<2x64xf32>
    %c0_1 = arith.constant 0 : index
    %c0_2 = arith.constant 0 : index
    %c0_3 = arith.constant 0 : index
    %1 = vector.load %arg0[%c0_1, %c0_2, %c0_3] : memref<2x8x64xf32, #tpu.memory_space<vmem>>, vector<2x8x64xf32>
    %2 = vector.shape_cast %1 : vector<2x8x64xf32> to vector<16x64xf32>
    %3 = vector.extract_strided_slice %0 {offsets = [0, 0], sizes = [1, 64], strides = [1, 1]} : vector<2x64xf32> to vector<1x64xf32>
    %4 = vector.extract_strided_slice %0 {offsets = [1, 0], sizes = [1, 64], strides = [1, 1]} : vector<2x64xf32> to vector<1x64xf32>
    %cst = arith.constant dense<0.000000e+00> : vector<16xf32>
    %5 = vector.multi_reduction <add>, %2, %cst [1] : vector<16x64xf32> to vector<16xf32>
    %6 = vector.shape_cast %5 : vector<16xf32> to vector<16x1xf32>
    %cst_4 = arith.constant 6.400000e+01 : f32
    %7 = vector.broadcast %cst_4 : f32 to vector<16x1xf32>
    %8 = arith.divf %6, %7 : vector<16x1xf32>
    %9 = vector.broadcast %8 : vector<16x1xf32> to vector<16x64xf32>
    %10 = arith.subf %2, %9 : vector<16x64xf32>
    %11 = arith.mulf %10, %10 : vector<16x64xf32>
    %cst_5 = arith.constant dense<0.000000e+00> : vector<16xf32>
    %12 = vector.multi_reduction <add>, %11, %cst_5 [1] : vector<16x64xf32> to vector<16xf32>
    %13 = vector.shape_cast %12 : vector<16xf32> to vector<16x1xf32>
    %cst_6 = arith.constant 6.400000e+01 : f32
    %14 = vector.broadcast %cst_6 : f32 to vector<16x1xf32>
    %15 = arith.divf %13, %14 : vector<16x1xf32>
    %cst_7 = arith.constant 9.99999996E-13 : f32
    %16 = vector.broadcast %cst_7 : f32 to vector<16x1xf32>
    %17 = arith.addf %15, %16 : vector<16x1xf32>
    %18 = math.rsqrt %17 : vector<16x1xf32>
    %19 = vector.broadcast %18 : vector<16x1xf32> to vector<16x64xf32>
    %20 = arith.mulf %10, %19 : vector<16x64xf32>
    %21 = vector.broadcast %3 : vector<1x64xf32> to vector<16x64xf32>
    %22 = arith.mulf %20, %21 : vector<16x64xf32>
    %23 = vector.broadcast %4 : vector<1x64xf32> to vector<16x64xf32>
    %24 = arith.addf %22, %23 : vector<16x64xf32>
    %c0_8 = arith.constant 0 : index
    %c0_9 = arith.constant 0 : index
    %25 = vector.load %arg1[%c0_8, %c0_9] : memref<16x16xf32, #tpu.memory_space<vmem>>, vector<16x16xf32>
    %c0_10 = arith.constant 0 : index
    %c0_11 = arith.constant 0 : index
    %c0_12 = arith.constant 0 : index
    %26 = vector.load %arg9[%c0_10, %c0_11, %c0_12] : memref<2x6x64xf32, #tpu.memory_space<vmem>>, vector<1x6x64xf32>
    %27 = vector.shape_cast %26 : vector<1x6x64xf32> to vector<6x64xf32>
    %28 = vector.extract_strided_slice %27 {offsets = [0, 0], sizes = [1, 64], strides = [1, 1]} : vector<6x64xf32> to vector<1x64xf32>
    %29 = vector.extract_strided_slice %27 {offsets = [1, 0], sizes = [1, 64], strides = [1, 1]} : vector<6x64xf32> to vector<1x64xf32>
    %30 = vector.extract_strided_slice %27 {offsets = [2, 0], sizes = [1, 64], strides = [1, 1]} : vector<6x64xf32> to vector<1x64xf32>
    %31 = vector.extract_strided_slice %27 {offsets = [3, 0], sizes = [1, 64], strides = [1, 1]} : vector<6x64xf32> to vector<1x64xf32>
    %32 = vector.extract_strided_slice %27 {offsets = [4, 0], sizes = [1, 64], strides = [1, 1]} : vector<6x64xf32> to vector<1x64xf32>
    %33 = vector.extract_strided_slice %27 {offsets = [5, 0], sizes = [1, 64], strides = [1, 1]} : vector<6x64xf32> to vector<1x64xf32>
    %34 = arith.truncf %24 : vector<16x64xf32> to vector<16x64xbf16>
    %c0_13 = arith.constant 0 : index
    %c0_14 = arith.constant 0 : index
    %c0_15 = arith.constant 0 : index
    %35 = vector.load %arg3[%c0_13, %c0_14, %c0_15] : memref<2x64x192xbf16, #tpu.memory_space<vmem>>, vector<1x64x192xbf16>
    %36 = vector.shape_cast %35 : vector<1x64x192xbf16> to vector<64x192xbf16>
    %cst_16 = arith.constant dense<0.000000e+00> : vector<16x192xf32>
    %37 = tpu.matmul %34, %36, %cst_16 {dimension_numbers = #tpu.dot_dimension_numbers<[1], [0], [0], [1], [0, 0, 1, 1], [], []>} : vector<16x64xbf16>, vector<64x192xbf16>, vector<16x192xf32> -> vector<16x192xf32>
    %c0_17 = arith.constant 0 : index
    %c0_18 = arith.constant 0 : index
    %c0_19 = arith.constant 0 : index
    %38 = vector.load %arg4[%c0_17, %c0_18, %c0_19] : memref<2x1x192xf32, #tpu.memory_space<vmem>>, vector<1x1x192xf32>
    %39 = vector.shape_cast %38 : vector<1x1x192xf32> to vector<1x192xf32>
    %40 = vector.broadcast %39 : vector<1x192xf32> to vector<16x192xf32>
    %41 = arith.addf %37, %40 : vector<16x192xf32>
    %42 = vector.extract_strided_slice %41 {offsets = [0, 0], sizes = [16, 16], strides = [1, 1]} : vector<16x192xf32> to vector<16x16xf32>
    %43 = arith.truncf %42 : vector<16x16xf32> to vector<16x16xbf16>
    %44 = vector.extract_strided_slice %41 {offsets = [0, 64], sizes = [16, 16], strides = [1, 1]} : vector<16x192xf32> to vector<16x16xf32>
    %45 = arith.truncf %44 : vector<16x16xf32> to vector<16x16xbf16>
    %46 = vector.extract_strided_slice %41 {offsets = [0, 128], sizes = [16, 16], strides = [1, 1]} : vector<16x192xf32> to vector<16x16xf32>
    %47 = arith.truncf %46 : vector<16x16xf32> to vector<16x16xbf16>
    %cst_20 = arith.constant dense<0.000000e+00> : vector<16x16xf32>
    %48 = tpu.matmul %43, %45, %cst_20 {dimension_numbers = #tpu.dot_dimension_numbers<[1], [1], [0], [0], [0, 0, 1, 0], [], []>} : vector<16x16xbf16>, vector<16x16xbf16>, vector<16x16xf32> -> vector<16x16xf32>
    %49 = arith.addf %48, %25 : vector<16x16xf32>
    %cst_21 = arith.constant dense<0xFF800000> : vector<16xf32>
    %50 = vector.multi_reduction <maximumf>, %49, %cst_21 [1] : vector<16x16xf32> to vector<16xf32>
    %51 = vector.shape_cast %50 : vector<16xf32> to vector<16x1xf32>
    %52 = vector.broadcast %51 : vector<16x1xf32> to vector<16x16xf32>
    %53 = arith.subf %49, %52 : vector<16x16xf32>
    %54 = math.exp %53 : vector<16x16xf32>
    %cst_22 = arith.constant dense<0.000000e+00> : vector<16xf32>
    %55 = vector.multi_reduction <add>, %54, %cst_22 [1] : vector<16x16xf32> to vector<16xf32>
    %56 = vector.shape_cast %55 : vector<16xf32> to vector<16x1xf32>
    %57 = tpu.reciprocal %56 {approx = true} : vector<16x1xf32> -> vector<16x1xf32>
    %58 = vector.broadcast %57 : vector<16x1xf32> to vector<16x16xf32>
    %59 = arith.mulf %54, %58 : vector<16x16xf32>
    %60 = arith.truncf %59 : vector<16x16xf32> to vector<16x16xbf16>
    %cst_23 = arith.constant dense<0.000000e+00> : vector<16x16xf32>
    %61 = tpu.matmul %60, %47, %cst_23 {dimension_numbers = #tpu.dot_dimension_numbers<[1], [0], [0], [1], [0, 0, 1, 1], [], []>} : vector<16x16xbf16>, vector<16x16xbf16>, vector<16x16xf32> -> vector<16x16xf32>
    %62 = vector.extract_strided_slice %41 {offsets = [0, 16], sizes = [16, 16], strides = [1, 1]} : vector<16x192xf32> to vector<16x16xf32>
    %63 = arith.truncf %62 : vector<16x16xf32> to vector<16x16xbf16>
    %64 = vector.extract_strided_slice %41 {offsets = [0, 80], sizes = [16, 16], strides = [1, 1]} : vector<16x192xf32> to vector<16x16xf32>
    %65 = arith.truncf %64 : vector<16x16xf32> to vector<16x16xbf16>
    %66 = vector.extract_strided_slice %41 {offsets = [0, 144], sizes = [16, 16], strides = [1, 1]} : vector<16x192xf32> to vector<16x16xf32>
    %67 = arith.truncf %66 : vector<16x16xf32> to vector<16x16xbf16>
    %cst_24 = arith.constant dense<0.000000e+00> : vector<16x16xf32>
    %68 = tpu.matmul %63, %65, %cst_24 {dimension_numbers = #tpu.dot_dimension_numbers<[1], [1], [0], [0], [0, 0, 1, 0], [], []>} : vector<16x16xbf16>, vector<16x16xbf16>, vector<16x16xf32> -> vector<16x16xf32>
    %69 = arith.addf %68, %25 : vector<16x16xf32>
    %cst_25 = arith.constant dense<0xFF800000> : vector<16xf32>
    %70 = vector.multi_reduction <maximumf>, %69, %cst_25 [1] : vector<16x16xf32> to vector<16xf32>
    %71 = vector.shape_cast %70 : vector<16xf32> to vector<16x1xf32>
    %72 = vector.broadcast %71 : vector<16x1xf32> to vector<16x16xf32>
    %73 = arith.subf %69, %72 : vector<16x16xf32>
    %74 = math.exp %73 : vector<16x16xf32>
    %cst_26 = arith.constant dense<0.000000e+00> : vector<16xf32>
    %75 = vector.multi_reduction <add>, %74, %cst_26 [1] : vector<16x16xf32> to vector<16xf32>
    %76 = vector.shape_cast %75 : vector<16xf32> to vector<16x1xf32>
    %77 = tpu.reciprocal %76 {approx = true} : vector<16x1xf32> -> vector<16x1xf32>
    %78 = vector.broadcast %77 : vector<16x1xf32> to vector<16x16xf32>
    %79 = arith.mulf %74, %78 : vector<16x16xf32>
    %80 = arith.truncf %79 : vector<16x16xf32> to vector<16x16xbf16>
    %cst_27 = arith.constant dense<0.000000e+00> : vector<16x16xf32>
    %81 = tpu.matmul %80, %67, %cst_27 {dimension_numbers = #tpu.dot_dimension_numbers<[1], [0], [0], [1], [0, 0, 1, 1], [], []>} : vector<16x16xbf16>, vector<16x16xbf16>, vector<16x16xf32> -> vector<16x16xf32>
    %82 = vector.extract_strided_slice %41 {offsets = [0, 32], sizes = [16, 16], strides = [1, 1]} : vector<16x192xf32> to vector<16x16xf32>
    %83 = arith.truncf %82 : vector<16x16xf32> to vector<16x16xbf16>
    %84 = vector.extract_strided_slice %41 {offsets = [0, 96], sizes = [16, 16], strides = [1, 1]} : vector<16x192xf32> to vector<16x16xf32>
    %85 = arith.truncf %84 : vector<16x16xf32> to vector<16x16xbf16>
    %86 = vector.extract_strided_slice %41 {offsets = [0, 160], sizes = [16, 16], strides = [1, 1]} : vector<16x192xf32> to vector<16x16xf32>
    %87 = arith.truncf %86 : vector<16x16xf32> to vector<16x16xbf16>
    %cst_28 = arith.constant dense<0.000000e+00> : vector<16x16xf32>
    %88 = tpu.matmul %83, %85, %cst_28 {dimension_numbers = #tpu.dot_dimension_numbers<[1], [1], [0], [0], [0, 0, 1, 0], [], []>} : vector<16x16xbf16>, vector<16x16xbf16>, vector<16x16xf32> -> vector<16x16xf32>
    %89 = arith.addf %88, %25 : vector<16x16xf32>
    %cst_29 = arith.constant dense<0xFF800000> : vector<16xf32>
    %90 = vector.multi_reduction <maximumf>, %89, %cst_29 [1] : vector<16x16xf32> to vector<16xf32>
    %91 = vector.shape_cast %90 : vector<16xf32> to vector<16x1xf32>
    %92 = vector.broadcast %91 : vector<16x1xf32> to vector<16x16xf32>
    %93 = arith.subf %89, %92 : vector<16x16xf32>
    %94 = math.exp %93 : vector<16x16xf32>
    %cst_30 = arith.constant dense<0.000000e+00> : vector<16xf32>
    %95 = vector.multi_reduction <add>, %94, %cst_30 [1] : vector<16x16xf32> to vector<16xf32>
    %96 = vector.shape_cast %95 : vector<16xf32> to vector<16x1xf32>
    %97 = tpu.reciprocal %96 {approx = true} : vector<16x1xf32> -> vector<16x1xf32>
    %98 = vector.broadcast %97 : vector<16x1xf32> to vector<16x16xf32>
    %99 = arith.mulf %94, %98 : vector<16x16xf32>
    %100 = arith.truncf %99 : vector<16x16xf32> to vector<16x16xbf16>
    %cst_31 = arith.constant dense<0.000000e+00> : vector<16x16xf32>
    %101 = tpu.matmul %100, %87, %cst_31 {dimension_numbers = #tpu.dot_dimension_numbers<[1], [0], [0], [1], [0, 0, 1, 1], [], []>} : vector<16x16xbf16>, vector<16x16xbf16>, vector<16x16xf32> -> vector<16x16xf32>
    %102 = vector.extract_strided_slice %41 {offsets = [0, 48], sizes = [16, 16], strides = [1, 1]} : vector<16x192xf32> to vector<16x16xf32>
    %103 = arith.truncf %102 : vector<16x16xf32> to vector<16x16xbf16>
    %104 = vector.extract_strided_slice %41 {offsets = [0, 112], sizes = [16, 16], strides = [1, 1]} : vector<16x192xf32> to vector<16x16xf32>
    %105 = arith.truncf %104 : vector<16x16xf32> to vector<16x16xbf16>
    %106 = vector.extract_strided_slice %41 {offsets = [0, 176], sizes = [16, 16], strides = [1, 1]} : vector<16x192xf32> to vector<16x16xf32>
    %107 = arith.truncf %106 : vector<16x16xf32> to vector<16x16xbf16>
    %cst_32 = arith.constant dense<0.000000e+00> : vector<16x16xf32>
    %108 = tpu.matmul %103, %105, %cst_32 {dimension_numbers = #tpu.dot_dimension_numbers<[1], [1], [0], [0], [0, 0, 1, 0], [], []>} : vector<16x16xbf16>, vector<16x16xbf16>, vector<16x16xf32> -> vector<16x16xf32>
    %109 = arith.addf %108, %25 : vector<16x16xf32>
    %cst_33 = arith.constant dense<0xFF800000> : vector<16xf32>
    %110 = vector.multi_reduction <maximumf>, %109, %cst_33 [1] : vector<16x16xf32> to vector<16xf32>
    %111 = vector.shape_cast %110 : vector<16xf32> to vector<16x1xf32>
    %112 = vector.broadcast %111 : vector<16x1xf32> to vector<16x16xf32>
    %113 = arith.subf %109, %112 : vector<16x16xf32>
    %114 = math.exp %113 : vector<16x16xf32>
    %cst_34 = arith.constant dense<0.000000e+00> : vector<16xf32>
    %115 = vector.multi_reduction <add>, %114, %cst_34 [1] : vector<16x16xf32> to vector<16xf32>
    %116 = vector.shape_cast %115 : vector<16xf32> to vector<16x1xf32>
    %117 = tpu.reciprocal %116 {approx = true} : vector<16x1xf32> -> vector<16x1xf32>
    %118 = vector.broadcast %117 : vector<16x1xf32> to vector<16x16xf32>
    %119 = arith.mulf %114, %118 : vector<16x16xf32>
    %120 = arith.truncf %119 : vector<16x16xf32> to vector<16x16xbf16>
    %cst_35 = arith.constant dense<0.000000e+00> : vector<16x16xf32>
    %121 = tpu.matmul %120, %107, %cst_35 {dimension_numbers = #tpu.dot_dimension_numbers<[1], [0], [0], [1], [0, 0, 1, 1], [], []>} : vector<16x16xbf16>, vector<16x16xbf16>, vector<16x16xf32> -> vector<16x16xf32>
    %122 = tpu.concatenate %61, %81, %101, %121 in 1 : vector<16x16xf32>, vector<16x16xf32>, vector<16x16xf32>, vector<16x16xf32> -> vector<16x64xf32>
    %123 = arith.truncf %122 : vector<16x64xf32> to vector<16x64xbf16>
    %c0_36 = arith.constant 0 : index
    %c0_37 = arith.constant 0 : index
    %c0_38 = arith.constant 0 : index
    %124 = vector.load %arg5[%c0_36, %c0_37, %c0_38] : memref<2x64x64xbf16, #tpu.memory_space<vmem>>, vector<1x64x64xbf16>
    %125 = vector.shape_cast %124 : vector<1x64x64xbf16> to vector<64x64xbf16>
    %cst_39 = arith.constant dense<0.000000e+00> : vector<16x64xf32>
    %126 = tpu.matmul %123, %125, %cst_39 {dimension_numbers = #tpu.dot_dimension_numbers<[1], [0], [0], [1], [0, 0, 1, 1], [], []>} : vector<16x64xbf16>, vector<64x64xbf16>, vector<16x64xf32> -> vector<16x64xf32>
    %127 = vector.broadcast %28 : vector<1x64xf32> to vector<16x64xf32>
    %128 = arith.addf %126, %127 : vector<16x64xf32>
    %129 = arith.addf %128, %24 : vector<16x64xf32>
    %cst_40 = arith.constant dense<0.000000e+00> : vector<16xf32>
    %130 = vector.multi_reduction <add>, %129, %cst_40 [1] : vector<16x64xf32> to vector<16xf32>
    %131 = vector.shape_cast %130 : vector<16xf32> to vector<16x1xf32>
    %cst_41 = arith.constant 6.400000e+01 : f32
    %132 = vector.broadcast %cst_41 : f32 to vector<16x1xf32>
    %133 = arith.divf %131, %132 : vector<16x1xf32>
    %134 = vector.broadcast %133 : vector<16x1xf32> to vector<16x64xf32>
    %135 = arith.subf %129, %134 : vector<16x64xf32>
    %136 = arith.mulf %135, %135 : vector<16x64xf32>
    %cst_42 = arith.constant dense<0.000000e+00> : vector<16xf32>
    %137 = vector.multi_reduction <add>, %136, %cst_42 [1] : vector<16x64xf32> to vector<16xf32>
    %138 = vector.shape_cast %137 : vector<16xf32> to vector<16x1xf32>
    %cst_43 = arith.constant 6.400000e+01 : f32
    %139 = vector.broadcast %cst_43 : f32 to vector<16x1xf32>
    %140 = arith.divf %138, %139 : vector<16x1xf32>
    %cst_44 = arith.constant 9.99999996E-13 : f32
    %141 = vector.broadcast %cst_44 : f32 to vector<16x1xf32>
    %142 = arith.addf %140, %141 : vector<16x1xf32>
    %143 = math.rsqrt %142 : vector<16x1xf32>
    %144 = vector.broadcast %143 : vector<16x1xf32> to vector<16x64xf32>
    %145 = arith.mulf %135, %144 : vector<16x64xf32>
    %146 = vector.broadcast %29 : vector<1x64xf32> to vector<16x64xf32>
    %147 = arith.mulf %145, %146 : vector<16x64xf32>
    %148 = vector.broadcast %30 : vector<1x64xf32> to vector<16x64xf32>
    %149 = arith.addf %147, %148 : vector<16x64xf32>
    %150 = arith.truncf %149 : vector<16x64xf32> to vector<16x64xbf16>
    %c0_45 = arith.constant 0 : index
    %c0_46 = arith.constant 0 : index
    %c0_47 = arith.constant 0 : index
    %151 = vector.load %arg6[%c0_45, %c0_46, %c0_47] : memref<2x64x128xbf16, #tpu.memory_space<vmem>>, vector<1x64x128xbf16>
    %152 = vector.shape_cast %151 : vector<1x64x128xbf16> to vector<64x128xbf16>
    %cst_48 = arith.constant dense<0.000000e+00> : vector<16x128xf32>
    %153 = tpu.matmul %150, %152, %cst_48 {dimension_numbers = #tpu.dot_dimension_numbers<[1], [0], [0], [1], [0, 0, 1, 1], [], []>} : vector<16x64xbf16>, vector<64x128xbf16>, vector<16x128xf32> -> vector<16x128xf32>
    %c0_49 = arith.constant 0 : index
    %c0_50 = arith.constant 0 : index
    %c0_51 = arith.constant 0 : index
    %154 = vector.load %arg7[%c0_49, %c0_50, %c0_51] : memref<2x1x128xf32, #tpu.memory_space<vmem>>, vector<1x1x128xf32>
    %155 = vector.shape_cast %154 : vector<1x1x128xf32> to vector<1x128xf32>
    %156 = vector.broadcast %155 : vector<1x128xf32> to vector<16x128xf32>
    %157 = arith.addf %153, %156 : vector<16x128xf32>
    %158 = arith.mulf %157, %157 : vector<16x128xf32>
    %159 = arith.mulf %157, %158 : vector<16x128xf32>
    %cst_52 = arith.constant 4.471500e-02 : f32
    %160 = vector.broadcast %cst_52 : f32 to vector<16x128xf32>
    %161 = arith.mulf %160, %159 : vector<16x128xf32>
    %162 = arith.addf %157, %161 : vector<16x128xf32>
    %cst_53 = arith.constant 0.797884583 : f32
    %163 = vector.broadcast %cst_53 : f32 to vector<16x128xf32>
    %164 = arith.mulf %163, %162 : vector<16x128xf32>
    %165 = math.tanh %164 : vector<16x128xf32>
    %cst_54 = arith.constant 1.000000e+00 : f32
    %166 = vector.broadcast %cst_54 : f32 to vector<16x128xf32>
    %167 = arith.addf %166, %165 : vector<16x128xf32>
    %cst_55 = arith.constant 5.000000e-01 : f32
    %168 = vector.broadcast %cst_55 : f32 to vector<16x128xf32>
    %169 = arith.mulf %168, %167 : vector<16x128xf32>
    %170 = arith.mulf %157, %169 : vector<16x128xf32>
    %171 = arith.truncf %170 : vector<16x128xf32> to vector<16x128xbf16>
    %c0_56 = arith.constant 0 : index
    %c0_57 = arith.constant 0 : index
    %c0_58 = arith.constant 0 : index
    %172 = vector.load %arg8[%c0_56, %c0_57, %c0_58] : memref<2x128x64xbf16, #tpu.memory_space<vmem>>, vector<1x128x64xbf16>
    %173 = vector.shape_cast %172 : vector<1x128x64xbf16> to vector<128x64xbf16>
    %cst_59 = arith.constant dense<0.000000e+00> : vector<16x64xf32>
    %174 = tpu.matmul %171, %173, %cst_59 {dimension_numbers = #tpu.dot_dimension_numbers<[1], [0], [0], [1], [0, 0, 1, 1], [], []>} : vector<16x128xbf16>, vector<128x64xbf16>, vector<16x64xf32> -> vector<16x64xf32>
    %175 = vector.broadcast %31 : vector<1x64xf32> to vector<16x64xf32>
    %176 = arith.addf %174, %175 : vector<16x64xf32>
    %177 = arith.addf %176, %149 : vector<16x64xf32>
    %cst_60 = arith.constant dense<0.000000e+00> : vector<16xf32>
    %178 = vector.multi_reduction <add>, %177, %cst_60 [1] : vector<16x64xf32> to vector<16xf32>
    %179 = vector.shape_cast %178 : vector<16xf32> to vector<16x1xf32>
    %cst_61 = arith.constant 6.400000e+01 : f32
    %180 = vector.broadcast %cst_61 : f32 to vector<16x1xf32>
    %181 = arith.divf %179, %180 : vector<16x1xf32>
    %182 = vector.broadcast %181 : vector<16x1xf32> to vector<16x64xf32>
    %183 = arith.subf %177, %182 : vector<16x64xf32>
    %184 = arith.mulf %183, %183 : vector<16x64xf32>
    %cst_62 = arith.constant dense<0.000000e+00> : vector<16xf32>
    %185 = vector.multi_reduction <add>, %184, %cst_62 [1] : vector<16x64xf32> to vector<16xf32>
    %186 = vector.shape_cast %185 : vector<16xf32> to vector<16x1xf32>
    %cst_63 = arith.constant 6.400000e+01 : f32
    %187 = vector.broadcast %cst_63 : f32 to vector<16x1xf32>
    %188 = arith.divf %186, %187 : vector<16x1xf32>
    %cst_64 = arith.constant 9.99999996E-13 : f32
    %189 = vector.broadcast %cst_64 : f32 to vector<16x1xf32>
    %190 = arith.addf %188, %189 : vector<16x1xf32>
    %191 = math.rsqrt %190 : vector<16x1xf32>
    %192 = vector.broadcast %191 : vector<16x1xf32> to vector<16x64xf32>
    %193 = arith.mulf %183, %192 : vector<16x64xf32>
    %194 = vector.broadcast %32 : vector<1x64xf32> to vector<16x64xf32>
    %195 = arith.mulf %193, %194 : vector<16x64xf32>
    %196 = vector.broadcast %33 : vector<1x64xf32> to vector<16x64xf32>
    %197 = arith.addf %195, %196 : vector<16x64xf32>
    %c1 = arith.constant 1 : index
    %c0_65 = arith.constant 0 : index
    %c0_66 = arith.constant 0 : index
    %198 = vector.load %arg9[%c1, %c0_65, %c0_66] : memref<2x6x64xf32, #tpu.memory_space<vmem>>, vector<1x6x64xf32>
    %199 = vector.shape_cast %198 : vector<1x6x64xf32> to vector<6x64xf32>
    %200 = vector.extract_strided_slice %199 {offsets = [0, 0], sizes = [1, 64], strides = [1, 1]} : vector<6x64xf32> to vector<1x64xf32>
    %201 = vector.extract_strided_slice %199 {offsets = [1, 0], sizes = [1, 64], strides = [1, 1]} : vector<6x64xf32> to vector<1x64xf32>
    %202 = vector.extract_strided_slice %199 {offsets = [2, 0], sizes = [1, 64], strides = [1, 1]} : vector<6x64xf32> to vector<1x64xf32>
    %203 = vector.extract_strided_slice %199 {offsets = [3, 0], sizes = [1, 64], strides = [1, 1]} : vector<6x64xf32> to vector<1x64xf32>
    %204 = vector.extract_strided_slice %199 {offsets = [4, 0], sizes = [1, 64], strides = [1, 1]} : vector<6x64xf32> to vector<1x64xf32>
    %205 = vector.extract_strided_slice %199 {offsets = [5, 0], sizes = [1, 64], strides = [1, 1]} : vector<6x64xf32> to vector<1x64xf32>
    %206 = arith.truncf %197 : vector<16x64xf32> to vector<16x64xbf16>
    %c1_67 = arith.constant 1 : index
    %c0_68 = arith.constant 0 : index
    %c0_69 = arith.constant 0 : index
    %207 = vector.load %arg3[%c1_67, %c0_68, %c0_69] : memref<2x64x192xbf16, #tpu.memory_space<vmem>>, vector<1x64x192xbf16>
    %208 = vector.shape_cast %207 : vector<1x64x192xbf16> to vector<64x192xbf16>
    %cst_70 = arith.constant dense<0.000000e+00> : vector<16x192xf32>
    %209 = tpu.matmul %206, %208, %cst_70 {dimension_numbers = #tpu.dot_dimension_numbers<[1], [0], [0], [1], [0, 0, 1, 1], [], []>} : vector<16x64xbf16>, vector<64x192xbf16>, vector<16x192xf32> -> vector<16x192xf32>
    %c1_71 = arith.constant 1 : index
    %c0_72 = arith.constant 0 : index
    %c0_73 = arith.constant 0 : index
    %210 = vector.load %arg4[%c1_71, %c0_72, %c0_73] : memref<2x1x192xf32, #tpu.memory_space<vmem>>, vector<1x1x192xf32>
    %211 = vector.shape_cast %210 : vector<1x1x192xf32> to vector<1x192xf32>
    %212 = vector.broadcast %211 : vector<1x192xf32> to vector<16x192xf32>
    %213 = arith.addf %209, %212 : vector<16x192xf32>
    %214 = vector.extract_strided_slice %213 {offsets = [0, 0], sizes = [16, 16], strides = [1, 1]} : vector<16x192xf32> to vector<16x16xf32>
    %215 = arith.truncf %214 : vector<16x16xf32> to vector<16x16xbf16>
    %216 = vector.extract_strided_slice %213 {offsets = [0, 64], sizes = [16, 16], strides = [1, 1]} : vector<16x192xf32> to vector<16x16xf32>
    %217 = arith.truncf %216 : vector<16x16xf32> to vector<16x16xbf16>
    %218 = vector.extract_strided_slice %213 {offsets = [0, 128], sizes = [16, 16], strides = [1, 1]} : vector<16x192xf32> to vector<16x16xf32>
    %219 = arith.truncf %218 : vector<16x16xf32> to vector<16x16xbf16>
    %cst_74 = arith.constant dense<0.000000e+00> : vector<16x16xf32>
    %220 = tpu.matmul %215, %217, %cst_74 {dimension_numbers = #tpu.dot_dimension_numbers<[1], [1], [0], [0], [0, 0, 1, 0], [], []>} : vector<16x16xbf16>, vector<16x16xbf16>, vector<16x16xf32> -> vector<16x16xf32>
    %221 = arith.addf %220, %25 : vector<16x16xf32>
    %cst_75 = arith.constant dense<0xFF800000> : vector<16xf32>
    %222 = vector.multi_reduction <maximumf>, %221, %cst_75 [1] : vector<16x16xf32> to vector<16xf32>
    %223 = vector.shape_cast %222 : vector<16xf32> to vector<16x1xf32>
    %224 = vector.broadcast %223 : vector<16x1xf32> to vector<16x16xf32>
    %225 = arith.subf %221, %224 : vector<16x16xf32>
    %226 = math.exp %225 : vector<16x16xf32>
    %cst_76 = arith.constant dense<0.000000e+00> : vector<16xf32>
    %227 = vector.multi_reduction <add>, %226, %cst_76 [1] : vector<16x16xf32> to vector<16xf32>
    %228 = vector.shape_cast %227 : vector<16xf32> to vector<16x1xf32>
    %229 = tpu.reciprocal %228 {approx = true} : vector<16x1xf32> -> vector<16x1xf32>
    %230 = vector.broadcast %229 : vector<16x1xf32> to vector<16x16xf32>
    %231 = arith.mulf %226, %230 : vector<16x16xf32>
    %232 = arith.truncf %231 : vector<16x16xf32> to vector<16x16xbf16>
    %cst_77 = arith.constant dense<0.000000e+00> : vector<16x16xf32>
    %233 = tpu.matmul %232, %219, %cst_77 {dimension_numbers = #tpu.dot_dimension_numbers<[1], [0], [0], [1], [0, 0, 1, 1], [], []>} : vector<16x16xbf16>, vector<16x16xbf16>, vector<16x16xf32> -> vector<16x16xf32>
    %234 = vector.extract_strided_slice %213 {offsets = [0, 16], sizes = [16, 16], strides = [1, 1]} : vector<16x192xf32> to vector<16x16xf32>
    %235 = arith.truncf %234 : vector<16x16xf32> to vector<16x16xbf16>
    %236 = vector.extract_strided_slice %213 {offsets = [0, 80], sizes = [16, 16], strides = [1, 1]} : vector<16x192xf32> to vector<16x16xf32>
    %237 = arith.truncf %236 : vector<16x16xf32> to vector<16x16xbf16>
    %238 = vector.extract_strided_slice %213 {offsets = [0, 144], sizes = [16, 16], strides = [1, 1]} : vector<16x192xf32> to vector<16x16xf32>
    %239 = arith.truncf %238 : vector<16x16xf32> to vector<16x16xbf16>
    %cst_78 = arith.constant dense<0.000000e+00> : vector<16x16xf32>
    %240 = tpu.matmul %235, %237, %cst_78 {dimension_numbers = #tpu.dot_dimension_numbers<[1], [1], [0], [0], [0, 0, 1, 0], [], []>} : vector<16x16xbf16>, vector<16x16xbf16>, vector<16x16xf32> -> vector<16x16xf32>
    %241 = arith.addf %240, %25 : vector<16x16xf32>
    %cst_79 = arith.constant dense<0xFF800000> : vector<16xf32>
    %242 = vector.multi_reduction <maximumf>, %241, %cst_79 [1] : vector<16x16xf32> to vector<16xf32>
    %243 = vector.shape_cast %242 : vector<16xf32> to vector<16x1xf32>
    %244 = vector.broadcast %243 : vector<16x1xf32> to vector<16x16xf32>
    %245 = arith.subf %241, %244 : vector<16x16xf32>
    %246 = math.exp %245 : vector<16x16xf32>
    %cst_80 = arith.constant dense<0.000000e+00> : vector<16xf32>
    %247 = vector.multi_reduction <add>, %246, %cst_80 [1] : vector<16x16xf32> to vector<16xf32>
    %248 = vector.shape_cast %247 : vector<16xf32> to vector<16x1xf32>
    %249 = tpu.reciprocal %248 {approx = true} : vector<16x1xf32> -> vector<16x1xf32>
    %250 = vector.broadcast %249 : vector<16x1xf32> to vector<16x16xf32>
    %251 = arith.mulf %246, %250 : vector<16x16xf32>
    %252 = arith.truncf %251 : vector<16x16xf32> to vector<16x16xbf16>
    %cst_81 = arith.constant dense<0.000000e+00> : vector<16x16xf32>
    %253 = tpu.matmul %252, %239, %cst_81 {dimension_numbers = #tpu.dot_dimension_numbers<[1], [0], [0], [1], [0, 0, 1, 1], [], []>} : vector<16x16xbf16>, vector<16x16xbf16>, vector<16x16xf32> -> vector<16x16xf32>
    %254 = vector.extract_strided_slice %213 {offsets = [0, 32], sizes = [16, 16], strides = [1, 1]} : vector<16x192xf32> to vector<16x16xf32>
    %255 = arith.truncf %254 : vector<16x16xf32> to vector<16x16xbf16>
    %256 = vector.extract_strided_slice %213 {offsets = [0, 96], sizes = [16, 16], strides = [1, 1]} : vector<16x192xf32> to vector<16x16xf32>
    %257 = arith.truncf %256 : vector<16x16xf32> to vector<16x16xbf16>
    %258 = vector.extract_strided_slice %213 {offsets = [0, 160], sizes = [16, 16], strides = [1, 1]} : vector<16x192xf32> to vector<16x16xf32>
    %259 = arith.truncf %258 : vector<16x16xf32> to vector<16x16xbf16>
    %cst_82 = arith.constant dense<0.000000e+00> : vector<16x16xf32>
    %260 = tpu.matmul %255, %257, %cst_82 {dimension_numbers = #tpu.dot_dimension_numbers<[1], [1], [0], [0], [0, 0, 1, 0], [], []>} : vector<16x16xbf16>, vector<16x16xbf16>, vector<16x16xf32> -> vector<16x16xf32>
    %261 = arith.addf %260, %25 : vector<16x16xf32>
    %cst_83 = arith.constant dense<0xFF800000> : vector<16xf32>
    %262 = vector.multi_reduction <maximumf>, %261, %cst_83 [1] : vector<16x16xf32> to vector<16xf32>
    %263 = vector.shape_cast %262 : vector<16xf32> to vector<16x1xf32>
    %264 = vector.broadcast %263 : vector<16x1xf32> to vector<16x16xf32>
    %265 = arith.subf %261, %264 : vector<16x16xf32>
    %266 = math.exp %265 : vector<16x16xf32>
    %cst_84 = arith.constant dense<0.000000e+00> : vector<16xf32>
    %267 = vector.multi_reduction <add>, %266, %cst_84 [1] : vector<16x16xf32> to vector<16xf32>
    %268 = vector.shape_cast %267 : vector<16xf32> to vector<16x1xf32>
    %269 = tpu.reciprocal %268 {approx = true} : vector<16x1xf32> -> vector<16x1xf32>
    %270 = vector.broadcast %269 : vector<16x1xf32> to vector<16x16xf32>
    %271 = arith.mulf %266, %270 : vector<16x16xf32>
    %272 = arith.truncf %271 : vector<16x16xf32> to vector<16x16xbf16>
    %cst_85 = arith.constant dense<0.000000e+00> : vector<16x16xf32>
    %273 = tpu.matmul %272, %259, %cst_85 {dimension_numbers = #tpu.dot_dimension_numbers<[1], [0], [0], [1], [0, 0, 1, 1], [], []>} : vector<16x16xbf16>, vector<16x16xbf16>, vector<16x16xf32> -> vector<16x16xf32>
    %274 = vector.extract_strided_slice %213 {offsets = [0, 48], sizes = [16, 16], strides = [1, 1]} : vector<16x192xf32> to vector<16x16xf32>
    %275 = arith.truncf %274 : vector<16x16xf32> to vector<16x16xbf16>
    %276 = vector.extract_strided_slice %213 {offsets = [0, 112], sizes = [16, 16], strides = [1, 1]} : vector<16x192xf32> to vector<16x16xf32>
    %277 = arith.truncf %276 : vector<16x16xf32> to vector<16x16xbf16>
    %278 = vector.extract_strided_slice %213 {offsets = [0, 176], sizes = [16, 16], strides = [1, 1]} : vector<16x192xf32> to vector<16x16xf32>
    %279 = arith.truncf %278 : vector<16x16xf32> to vector<16x16xbf16>
    %cst_86 = arith.constant dense<0.000000e+00> : vector<16x16xf32>
    %280 = tpu.matmul %275, %277, %cst_86 {dimension_numbers = #tpu.dot_dimension_numbers<[1], [1], [0], [0], [0, 0, 1, 0], [], []>} : vector<16x16xbf16>, vector<16x16xbf16>, vector<16x16xf32> -> vector<16x16xf32>
    %281 = arith.addf %280, %25 : vector<16x16xf32>
    %cst_87 = arith.constant dense<0xFF800000> : vector<16xf32>
    %282 = vector.multi_reduction <maximumf>, %281, %cst_87 [1] : vector<16x16xf32> to vector<16xf32>
    %283 = vector.shape_cast %282 : vector<16xf32> to vector<16x1xf32>
    %284 = vector.broadcast %283 : vector<16x1xf32> to vector<16x16xf32>
    %285 = arith.subf %281, %284 : vector<16x16xf32>
    %286 = math.exp %285 : vector<16x16xf32>
    %cst_88 = arith.constant dense<0.000000e+00> : vector<16xf32>
    %287 = vector.multi_reduction <add>, %286, %cst_88 [1] : vector<16x16xf32> to vector<16xf32>
    %288 = vector.shape_cast %287 : vector<16xf32> to vector<16x1xf32>
    %289 = tpu.reciprocal %288 {approx = true} : vector<16x1xf32> -> vector<16x1xf32>
    %290 = vector.broadcast %289 : vector<16x1xf32> to vector<16x16xf32>
    %291 = arith.mulf %286, %290 : vector<16x16xf32>
    %292 = arith.truncf %291 : vector<16x16xf32> to vector<16x16xbf16>
    %cst_89 = arith.constant dense<0.000000e+00> : vector<16x16xf32>
    %293 = tpu.matmul %292, %279, %cst_89 {dimension_numbers = #tpu.dot_dimension_numbers<[1], [0], [0], [1], [0, 0, 1, 1], [], []>} : vector<16x16xbf16>, vector<16x16xbf16>, vector<16x16xf32> -> vector<16x16xf32>
    %294 = tpu.concatenate %233, %253, %273, %293 in 1 : vector<16x16xf32>, vector<16x16xf32>, vector<16x16xf32>, vector<16x16xf32> -> vector<16x64xf32>
    %295 = arith.truncf %294 : vector<16x64xf32> to vector<16x64xbf16>
    %c1_90 = arith.constant 1 : index
    %c0_91 = arith.constant 0 : index
    %c0_92 = arith.constant 0 : index
    %296 = vector.load %arg5[%c1_90, %c0_91, %c0_92] : memref<2x64x64xbf16, #tpu.memory_space<vmem>>, vector<1x64x64xbf16>
    %297 = vector.shape_cast %296 : vector<1x64x64xbf16> to vector<64x64xbf16>
    %cst_93 = arith.constant dense<0.000000e+00> : vector<16x64xf32>
    %298 = tpu.matmul %295, %297, %cst_93 {dimension_numbers = #tpu.dot_dimension_numbers<[1], [0], [0], [1], [0, 0, 1, 1], [], []>} : vector<16x64xbf16>, vector<64x64xbf16>, vector<16x64xf32> -> vector<16x64xf32>
    %299 = vector.broadcast %200 : vector<1x64xf32> to vector<16x64xf32>
    %300 = arith.addf %298, %299 : vector<16x64xf32>
    %301 = arith.addf %300, %197 : vector<16x64xf32>
    %cst_94 = arith.constant dense<0.000000e+00> : vector<16xf32>
    %302 = vector.multi_reduction <add>, %301, %cst_94 [1] : vector<16x64xf32> to vector<16xf32>
    %303 = vector.shape_cast %302 : vector<16xf32> to vector<16x1xf32>
    %cst_95 = arith.constant 6.400000e+01 : f32
    %304 = vector.broadcast %cst_95 : f32 to vector<16x1xf32>
    %305 = arith.divf %303, %304 : vector<16x1xf32>
    %306 = vector.broadcast %305 : vector<16x1xf32> to vector<16x64xf32>
    %307 = arith.subf %301, %306 : vector<16x64xf32>
    %308 = arith.mulf %307, %307 : vector<16x64xf32>
    %cst_96 = arith.constant dense<0.000000e+00> : vector<16xf32>
    %309 = vector.multi_reduction <add>, %308, %cst_96 [1] : vector<16x64xf32> to vector<16xf32>
    %310 = vector.shape_cast %309 : vector<16xf32> to vector<16x1xf32>
    %cst_97 = arith.constant 6.400000e+01 : f32
    %311 = vector.broadcast %cst_97 : f32 to vector<16x1xf32>
    %312 = arith.divf %310, %311 : vector<16x1xf32>
    %cst_98 = arith.constant 9.99999996E-13 : f32
    %313 = vector.broadcast %cst_98 : f32 to vector<16x1xf32>
    %314 = arith.addf %312, %313 : vector<16x1xf32>
    %315 = math.rsqrt %314 : vector<16x1xf32>
    %316 = vector.broadcast %315 : vector<16x1xf32> to vector<16x64xf32>
    %317 = arith.mulf %307, %316 : vector<16x64xf32>
    %318 = vector.broadcast %201 : vector<1x64xf32> to vector<16x64xf32>
    %319 = arith.mulf %317, %318 : vector<16x64xf32>
    %320 = vector.broadcast %202 : vector<1x64xf32> to vector<16x64xf32>
    %321 = arith.addf %319, %320 : vector<16x64xf32>
    %322 = arith.truncf %321 : vector<16x64xf32> to vector<16x64xbf16>
    %c1_99 = arith.constant 1 : index
    %c0_100 = arith.constant 0 : index
    %c0_101 = arith.constant 0 : index
    %323 = vector.load %arg6[%c1_99, %c0_100, %c0_101] : memref<2x64x128xbf16, #tpu.memory_space<vmem>>, vector<1x64x128xbf16>
    %324 = vector.shape_cast %323 : vector<1x64x128xbf16> to vector<64x128xbf16>
    %cst_102 = arith.constant dense<0.000000e+00> : vector<16x128xf32>
    %325 = tpu.matmul %322, %324, %cst_102 {dimension_numbers = #tpu.dot_dimension_numbers<[1], [0], [0], [1], [0, 0, 1, 1], [], []>} : vector<16x64xbf16>, vector<64x128xbf16>, vector<16x128xf32> -> vector<16x128xf32>
    %c1_103 = arith.constant 1 : index
    %c0_104 = arith.constant 0 : index
    %c0_105 = arith.constant 0 : index
    %326 = vector.load %arg7[%c1_103, %c0_104, %c0_105] : memref<2x1x128xf32, #tpu.memory_space<vmem>>, vector<1x1x128xf32>
    %327 = vector.shape_cast %326 : vector<1x1x128xf32> to vector<1x128xf32>
    %328 = vector.broadcast %327 : vector<1x128xf32> to vector<16x128xf32>
    %329 = arith.addf %325, %328 : vector<16x128xf32>
    %330 = arith.mulf %329, %329 : vector<16x128xf32>
    %331 = arith.mulf %329, %330 : vector<16x128xf32>
    %cst_106 = arith.constant 4.471500e-02 : f32
    %332 = vector.broadcast %cst_106 : f32 to vector<16x128xf32>
    %333 = arith.mulf %332, %331 : vector<16x128xf32>
    %334 = arith.addf %329, %333 : vector<16x128xf32>
    %cst_107 = arith.constant 0.797884583 : f32
    %335 = vector.broadcast %cst_107 : f32 to vector<16x128xf32>
    %336 = arith.mulf %335, %334 : vector<16x128xf32>
    %337 = math.tanh %336 : vector<16x128xf32>
    %cst_108 = arith.constant 1.000000e+00 : f32
    %338 = vector.broadcast %cst_108 : f32 to vector<16x128xf32>
    %339 = arith.addf %338, %337 : vector<16x128xf32>
    %cst_109 = arith.constant 5.000000e-01 : f32
    %340 = vector.broadcast %cst_109 : f32 to vector<16x128xf32>
    %341 = arith.mulf %340, %339 : vector<16x128xf32>
    %342 = arith.mulf %329, %341 : vector<16x128xf32>
    %343 = arith.truncf %342 : vector<16x128xf32> to vector<16x128xbf16>
    %c1_110 = arith.constant 1 : index
    %c0_111 = arith.constant 0 : index
    %c0_112 = arith.constant 0 : index
    %344 = vector.load %arg8[%c1_110, %c0_111, %c0_112] : memref<2x128x64xbf16, #tpu.memory_space<vmem>>, vector<1x128x64xbf16>
    %345 = vector.shape_cast %344 : vector<1x128x64xbf16> to vector<128x64xbf16>
    %cst_113 = arith.constant dense<0.000000e+00> : vector<16x64xf32>
    %346 = tpu.matmul %343, %345, %cst_113 {dimension_numbers = #tpu.dot_dimension_numbers<[1], [0], [0], [1], [0, 0, 1, 1], [], []>} : vector<16x128xbf16>, vector<128x64xbf16>, vector<16x64xf32> -> vector<16x64xf32>
    %347 = vector.broadcast %203 : vector<1x64xf32> to vector<16x64xf32>
    %348 = arith.addf %346, %347 : vector<16x64xf32>
    %349 = arith.addf %348, %321 : vector<16x64xf32>
    %cst_114 = arith.constant dense<0.000000e+00> : vector<16xf32>
    %350 = vector.multi_reduction <add>, %349, %cst_114 [1] : vector<16x64xf32> to vector<16xf32>
    %351 = vector.shape_cast %350 : vector<16xf32> to vector<16x1xf32>
    %cst_115 = arith.constant 6.400000e+01 : f32
    %352 = vector.broadcast %cst_115 : f32 to vector<16x1xf32>
    %353 = arith.divf %351, %352 : vector<16x1xf32>
    %354 = vector.broadcast %353 : vector<16x1xf32> to vector<16x64xf32>
    %355 = arith.subf %349, %354 : vector<16x64xf32>
    %356 = arith.mulf %355, %355 : vector<16x64xf32>
    %cst_116 = arith.constant dense<0.000000e+00> : vector<16xf32>
    %357 = vector.multi_reduction <add>, %356, %cst_116 [1] : vector<16x64xf32> to vector<16xf32>
    %358 = vector.shape_cast %357 : vector<16xf32> to vector<16x1xf32>
    %cst_117 = arith.constant 6.400000e+01 : f32
    %359 = vector.broadcast %cst_117 : f32 to vector<16x1xf32>
    %360 = arith.divf %358, %359 : vector<16x1xf32>
    %cst_118 = arith.constant 9.99999996E-13 : f32
    %361 = vector.broadcast %cst_118 : f32 to vector<16x1xf32>
    %362 = arith.addf %360, %361 : vector<16x1xf32>
    %363 = math.rsqrt %362 : vector<16x1xf32>
    %364 = vector.broadcast %363 : vector<16x1xf32> to vector<16x64xf32>
    %365 = arith.mulf %355, %364 : vector<16x64xf32>
    %366 = vector.broadcast %204 : vector<1x64xf32> to vector<16x64xf32>
    %367 = arith.mulf %365, %366 : vector<16x64xf32>
    %368 = vector.broadcast %205 : vector<1x64xf32> to vector<16x64xf32>
    %369 = arith.addf %367, %368 : vector<16x64xf32>
    %370 = vector.extract_strided_slice %369 {offsets = [0, 0], sizes = [1, 64], strides = [1, 1]} : vector<16x64xf32> to vector<1x64xf32>
    %371 = vector.extract_strided_slice %369 {offsets = [8, 0], sizes = [1, 64], strides = [1, 1]} : vector<16x64xf32> to vector<1x64xf32>
    %372 = tpu.concatenate %370, %371 in 0 : vector<1x64xf32>, vector<1x64xf32> -> vector<2x64xf32>
    %373 = arith.truncf %372 : vector<2x64xf32> to vector<2x64xbf16>
    %c0_119 = arith.constant 0 : index
    %c0_120 = arith.constant 0 : index
    %374 = vector.load %arg10[%c0_119, %c0_120] : memref<64x64xbf16, #tpu.memory_space<vmem>>, vector<64x64xbf16>
    %cst_121 = arith.constant dense<0.000000e+00> : vector<2x64xf32>
    %375 = tpu.matmul %373, %374, %cst_121 {dimension_numbers = #tpu.dot_dimension_numbers<[1], [0], [0], [1], [0, 0, 1, 1], [], []>} : vector<2x64xbf16>, vector<64x64xbf16>, vector<2x64xf32> -> vector<2x64xf32>
    %c0_122 = arith.constant 0 : index
    %c0_123 = arith.constant 0 : index
    %376 = vector.load %arg11[%c0_122, %c0_123] : memref<1x64xf32, #tpu.memory_space<vmem>>, vector<1x64xf32>
    %377 = vector.broadcast %376 : vector<1x64xf32> to vector<2x64xf32>
    %378 = arith.addf %375, %377 : vector<2x64xf32>
    %cst_124 = arith.constant 0.000000e+00 : f32
    %379 = vector.broadcast %cst_124 : f32 to vector<2x64xf32>
    %380 = arith.maximumf %378, %379 : vector<2x64xf32>
    %381 = arith.truncf %380 : vector<2x64xf32> to vector<2x64xbf16>
    %c0_125 = arith.constant 0 : index
    %c0_126 = arith.constant 0 : index
    %382 = vector.load %arg12[%c0_125, %c0_126] : memref<64x128xbf16, #tpu.memory_space<vmem>>, vector<64x128xbf16>
    %cst_127 = arith.constant dense<0.000000e+00> : vector<2x128xf32>
    %383 = tpu.matmul %381, %382, %cst_127 {dimension_numbers = #tpu.dot_dimension_numbers<[1], [0], [0], [1], [0, 0, 1, 1], [], []>} : vector<2x64xbf16>, vector<64x128xbf16>, vector<2x128xf32> -> vector<2x128xf32>
    %c0_128 = arith.constant 0 : index
    %c0_129 = arith.constant 0 : index
    %384 = vector.load %arg13[%c0_128, %c0_129] : memref<1x128xf32, #tpu.memory_space<vmem>>, vector<1x128xf32>
    %385 = vector.broadcast %384 : vector<1x128xf32> to vector<2x128xf32>
    %386 = arith.addf %383, %385 : vector<2x128xf32>
    %c0_130 = arith.constant 0 : index
    %c0_131 = arith.constant 0 : index
    %387 = vector.load %arg14[%c0_130, %c0_131] : memref<2x128xf32, #tpu.memory_space<vmem>>, vector<2x128xf32>
    tpu.vector_store %arg14[%c0_130, %c0_131], %386 {strides = array<i32>} : memref<2x128xf32, #tpu.memory_space<vmem>>, vector<2x128xf32>,
    return
  }
}

</mosaic_0001>

<llo_original>
// kernel: distilbert_forward.1
$region0: #{distilbert_forward.1}
  #allocation0 [shape = 'u32[]', space=smem, size = 0x4, offset = 0x4, fixed_abs, tag = 'smem constant byte address 0x4 - core index']
  #allocation1 [shape = 'u32[144,128]{1,0:T(1,128)}', space=vmem, size = 0x12000, scoped, tag = 'internal scratch']
  %s0 = inlined_call_operand.vmem [shape: f32[2,8,64], index: 0, kind: input, shape index: {}]
  %s1 = inlined_call_operand.vmem [shape: f32[16,16], index: 1, kind: input, shape index: {}]
  %s2 = inlined_call_operand.vmem [shape: f32[2,64], index: 2, kind: input, shape index: {}]
  %s3 = inlined_call_operand.vmem [shape: bf16[2,64,192], index: 3, kind: input, shape index: {}]
  %s4 = inlined_call_operand.vmem [shape: f32[2,1,192], index: 4, kind: input, shape index: {}]
  %s5 = inlined_call_operand.vmem [shape: bf16[2,64,64], index: 5, kind: input, shape index: {}]
  %s6 = inlined_call_operand.vmem [shape: bf16[2,64,128], index: 6, kind: input, shape index: {}]
  %s7 = inlined_call_operand.vmem [shape: f32[2,1,128], index: 7, kind: input, shape index: {}]
  %s8 = inlined_call_operand.vmem [shape: bf16[2,128,64], index: 8, kind: input, shape index: {}]
  %s9 = inlined_call_operand.vmem [shape: f32[2,6,64], index: 9, kind: input, shape index: {}]
  %s10 = inlined_call_operand.vmem [shape: bf16[64,64], index: 10, kind: input, shape index: {}]
  %s11 = inlined_call_operand.vmem [shape: f32[1,64], index: 11, kind: input, shape index: {}]
  %s12 = inlined_call_operand.vmem [shape: bf16[64,128], index: 12, kind: input, shape index: {}]
  %s13 = inlined_call_operand.vmem [shape: f32[1,128], index: 13, kind: input, shape index: {}]
  %s14 = inlined_call_operand.hbm [shape: f32[2,128], index: 14, kind: output, shape index: {}]
  %s15 = sld [smem:[#allocation0]]
  $region66: #{distilbert_forward.1} parent=0
    _
  %s17 = ssub.s32 1, %s15
  %s18 = scalar_select 0, %s17, %s15
  $region1: #{distilbert_forward.1} parent=0
    #allocation2 [shape = 'u8[1024]{0}', space=vmem, size = 0x400, scoped, tag = 'output window, operand 0, single buffered']
    #allocation3 [shape = 's32[1]{0}', space=sflag, size = 0x4, scoped, tag = 'scoped memory for distilbert_forward.1']
    %19 = vsyncpa [#allocation3], 0
    // Predicated region
    $region2: #{distilbert_forward.1} parent=1 // pred_check
      _
    $region3: #{distilbert_forward.1} parent=1 // pred_check_branch
      %21 = sbr.rel (0) target = $region5
    $region4: #{distilbert_forward.1} parent=1 // pred_region
      _
    $region5: #{distilbert_forward.1} parent=1 // pred_fallthru
      _
    // Predicated region
    $region6: #{distilbert_forward.1} parent=1 // pred_check
      _
    $region7: #{distilbert_forward.1} parent=1 // pred_check_branch
      %23 = sbr.rel (0) target = $region9
    $region8: #{distilbert_forward.1} parent=1 // pred_region
      _
    $region9: #{distilbert_forward.1} parent=1 // pred_fallthru
      _
    // Predicated region
    $region10: #{distilbert_forward.1} parent=1 // pred_check
      _
    $region11: #{distilbert_forward.1} parent=1 // pred_check_branch
      %25 = sbr.rel (0) target = $region13
    $region12: #{distilbert_forward.1} parent=1 // pred_region
      _
    $region13: #{distilbert_forward.1} parent=1 // pred_fallthru
      _
    // Predicated region
    $region14: #{distilbert_forward.1} parent=1 // pred_check
      _
    $region15: #{distilbert_forward.1} parent=1 // pred_check_branch
      %27 = sbr.rel (0) target = $region17
    $region16: #{distilbert_forward.1} parent=1 // pred_region
      _
    $region17: #{distilbert_forward.1} parent=1 // pred_fallthru
      _
    // Predicated region
    $region18: #{distilbert_forward.1} parent=1 // pred_check
      _
    $region19: #{distilbert_forward.1} parent=1 // pred_check_branch
      %29 = sbr.rel (0) target = $region21
    $region20: #{distilbert_forward.1} parent=1 // pred_region
      _
    $region21: #{distilbert_forward.1} parent=1 // pred_fallthru
      _
    // Predicated region
    $region22: #{distilbert_forward.1} parent=1 // pred_check
      _
    $region23: #{distilbert_forward.1} parent=1 // pred_check_branch
      %31 = sbr.rel (0) target = $region25
    $region24: #{distilbert_forward.1} parent=1 // pred_region
      _
    $region25: #{distilbert_forward.1} parent=1 // pred_fallthru
      _
    // Predicated region
    $region26: #{distilbert_forward.1} parent=1 // pred_check
      _
    $region27: #{distilbert_forward.1} parent=1 // pred_check_branch
      %33 = sbr.rel (0) target = $region29
    $region28: #{distilbert_forward.1} parent=1 // pred_region
      _
    $region29: #{distilbert_forward.1} parent=1 // pred_fallthru
      _
    // Predicated region
    $region30: #{distilbert_forward.1} parent=1 // pred_check
      _
    $region31: #{distilbert_forward.1} parent=1 // pred_check_branch
      %35 = sbr.rel (0) target = $region33
    $region32: #{distilbert_forward.1} parent=1 // pred_region
      _
    $region33: #{distilbert_forward.1} parent=1 // pred_fallthru
      _
    // Predicated region
    $region34: #{distilbert_forward.1} parent=1 // pred_check
      _
    $region35: #{distilbert_forward.1} parent=1 // pred_check_branch
      %37 = sbr.rel (0) target = $region37
    $region36: #{distilbert_forward.1} parent=1 // pred_region
      _
    $region37: #{distilbert_forward.1} parent=1 // pred_fallthru
      _
    // Predicated region
    $region38: #{distilbert_forward.1} parent=1 // pred_check
      _
    $region39: #{distilbert_forward.1} parent=1 // pred_check_branch
      %39 = sbr.rel (0) target = $region41
    $region40: #{distilbert_forward.1} parent=1 // pred_region
      _
    $region41: #{distilbert_forward.1} parent=1 // pred_fallthru
      _
    // Predicated region
    $region42: #{distilbert_forward.1} parent=1 // pred_check
      _
    $region43: #{distilbert_forward.1} parent=1 // pred_check_branch
      %41 = sbr.rel (0) target = $region45
    $region44: #{distilbert_forward.1} parent=1 // pred_region
      _
    $region45: #{distilbert_forward.1} parent=1 // pred_fallthru
      _
    // Predicated region
    $region46: #{distilbert_forward.1} parent=1 // pred_check
      _
    $region47: #{distilbert_forward.1} parent=1 // pred_check_branch
      %43 = sbr.rel (0) target = $region49
    $region48: #{distilbert_forward.1} parent=1 // pred_region
      _
    $region49: #{distilbert_forward.1} parent=1 // pred_fallthru
      _
    // Predicated region
    $region50: #{distilbert_forward.1} parent=1 // pred_check
      _
    $region51: #{distilbert_forward.1} parent=1 // pred_check_branch
      %45 = sbr.rel (0) target = $region53
    $region52: #{distilbert_forward.1} parent=1 // pred_region
      _
    $region53: #{distilbert_forward.1} parent=1 // pred_fallthru
      _
    // Predicated region
    $region54: #{distilbert_forward.1} parent=1 // pred_check
      _
    $region55: #{distilbert_forward.1} parent=1 // pred_check_branch
      %47 = sbr.rel (0) target = $region57
    $region56: #{distilbert_forward.1} parent=1 // pred_region
      _
    $region57: #{distilbert_forward.1} parent=1 // pred_fallthru
      _
    %v49 = vld [vmem:[%s2] sm:$0x3]
    %v50 = vld [vmem:[%s0] sm:$0xff]
    %v51 = vld [vmem:[%s0 + $0x8] sm:$0xff]
    %vm52 = vcmask 523264
    %v53 = vsel %vm52, %v50, 0.0
    %54 = vadd.xlane.f32.xlu0 %v53
    %v55 = vpop.xlane.xlu0 %54
    %v56 = vsel %vm52, %v51, 0.0
    %57 = vadd.xlane.f32.xlu0 %v56
    %v58 = vpop.xlane.xlu0 %57
    %v59 = vrcp.pop 64.0
    %v60 = vmul.f32 %v55, %v59
    %v61 = vmul.f32 %v58, %v59
    %v62 = vsub.f32 %v50, %v60
    %v63 = vsub.f32 %v51, %v61
    %v64 = vmul.f32 %v62, %v62
    %v65 = vmul.f32 %v63, %v63
    %v66 = vsel %vm52, %v64, 0.0
    %67 = vadd.xlane.f32.xlu0 %v66
    %v68 = vpop.xlane.xlu0 %67
    %v69 = vsel %vm52, %v65, 0.0
    %70 = vadd.xlane.f32.xlu0 %v69
    %v71 = vpop.xlane.xlu0 %70
    %v72 = vmul.f32 %v68, %v59
    %v73 = vmul.f32 %v71, %v59
    %v74 = vadd.f32 %v72, 1e-12
    %v75 = vadd.f32 %v73, 1e-12
    %v76 = vrsqrt.pop %v74
    %v77 = vrsqrt.pop %v75
    %v78 = vmul.f32 %v62, %v76
    %v79 = vmul.f32 %v63, %v77
    %v80 = vlaneseq
    %v81 = vshrl.u32 %v80, 7
    %v82 = vsub.s32 0, %v81
    %v83 = vrot.slane %v49, %v82
    %v84 = vmul.f32 %v78, %v83
    %v85 = vmul.f32 %v79, %v83
    %v86 = vlaneseq
    %v87 = vshrl.u32 %v86, 7
    %v88 = vsub.s32 1, %v87
    %v89 = vrot.slane %v49, %v88
    %v90 = vadd.f32 %v84, %v89
    %v91 = vadd.f32 %v85, %v89
    %v92 = vld [vmem:[%s1] sm:$0xff]
    %v93 = vld [vmem:[%s1 + $0x8] sm:$0xff]
    %v94 = vld [vmem:[%s9] sm:$0x3f]
    %v95 = vpack.c.bf16 %v91, %v90
    %v96 = vld [vmem:[%s3] sm:$0xff]
    %v97 = vld [vmem:[%s3 + $0x8] sm:$0xff]
    %v98 = vld [vmem:[%s3 + $0x10] sm:$0xff]
    %v99 = vld [vmem:[%s3 + $0x18] sm:$0xff]
    %v100 = vld [vmem:[%s3 + $0x20] sm:$0xff]
    %v101 = vld [vmem:[%s3 + $0x28] sm:$0xff]
    %v102 = vld [vmem:[%s3 + $0x30] sm:$0xff]
    %v103 = vld [vmem:[%s3 + $0x38] sm:$0xff]
    %v104 = vld [vmem:[%s4] sm:$0x3]
    %v106 = vlaneseq
    %v107 = vshrl.u32 %v106, 7
    %v108 = vsub.s32 0, %v107
    %v109 = vrot.slane %v104, %v108
    %v110 = vlaneseq
    %v111 = vshrl.u32 %v110, 7
    %v112 = vsub.s32 1, %v111
    %v113 = vrot.slane %v104, %v112
    %v124 = vunpack.c.l.b16 %v96
    %v125 = vunpack.c.h.b16 %v96
    %v126 = vunpack.c.l.b16 %v97
    %v127 = vunpack.c.h.b16 %v97
    %v128 = vunpack.c.l.b16 %v98
    %v129 = vunpack.c.h.b16 %v98
    %v130 = vunpack.c.l.b16 %v99
    %v131 = vunpack.c.h.b16 %v99
    %v132 = vunpack.c.l.b16 %v100
    %v133 = vunpack.c.h.b16 %v100
    %v134 = vunpack.c.l.b16 %v101
    %v135 = vunpack.c.h.b16 %v101
    %v136 = vunpack.c.l.b16 %v102
    %v137 = vunpack.c.h.b16 %v102
    %v138 = vunpack.c.l.b16 %v103
    %v139 = vunpack.c.h.b16 %v103
    %v140 = vpack.c.b16 %v126, %v124
    %v141 = vpack.c.b16 %v127, %v125
    %v142 = vpack.c.b16 %v130, %v128
    %v143 = vpack.c.b16 %v131, %v129
    %v144 = vpack.c.b16 %v134, %v132
    %v145 = vpack.c.b16 %v135, %v133
    %v146 = vpack.c.b16 %v138, %v136
    %v147 = vpack.c.b16 %v139, %v137
    %v157 = vsel %vm52, %v95, 0
    %159 = vmatprep.subr.bf16.mxu0 %v141
    %160 = vmatpush1.bf16.msra.mxu0 %v140
    %161 = vmatprep.subr.bf16.mxu0 %v143
    %162 = vmatpush1.bf16.msra.mxu0 %v142
    %163 = vmatprep.subr.bf16.mxu0 %v145
    %164 = vmatpush1.bf16.msra.mxu0 %v144
    %165 = vmatprep.subr.bf16.mxu0 %v147
    %166 = vmatpush1.bf16.msra.mxu0 %v146
    %167 = vmatprep.subr.bf16.mxu0 0
    %168 = vmatpush1.bf16.msra.mxu0 0
    %169 = vmatprep.subr.bf16.mxu0 0
    %170 = vmatpush1.bf16.msra.mxu0 0
    %171 = vmatprep.subr.bf16.mxu0 0
    %172 = vmatpush1.bf16.msra.mxu0 0
    %173 = vmatprep.subr.bf16.mxu0 0
    %174 = vmatpush1.bf16.msra.mxu0 0
    %175 = vmatprep.subr.bf16.mxu0 0
    %176 = vmatpush1.bf16.msra.mxu0 0
    %177 = vmatprep.subr.bf16.mxu0 0
    %178 = vmatpush1.bf16.msra.mxu0 0
    %179 = vmatprep.subr.bf16.mxu0 0
    %180 = vmatpush1.bf16.msra.mxu0 0
    %181 = vmatprep.subr.bf16.mxu0 0
    %182 = vmatpush1.bf16.msra.mxu0 0
    %183 = vmatprep.subr.bf16.mxu0 0
    %184 = vmatpush1.bf16.msra.mxu0 0
    %185 = vmatprep.subr.bf16.mxu0 0
    %186 = vmatpush1.bf16.msra.mxu0 0
    %187 = vmatprep.subr.bf16.mxu0 0
    %188 = vmatpush1.bf16.msra.mxu0 0
    %189 = vmatprep.subr.bf16.mxu0 0
    %190 = vmatpush1.bf16.msra.mxu0 0
    %191 = vmatprep.mubr.bf16.mxu0 0
    %192 = vmatmul.mubr.bf16.gmra.mrb[0].mxu0 %v157
    %v193 = vpop.f32.mrb[0].mxu0
    %v194 = vadd.f32 %v109, %v193
    %v195 = vpop.f32.mrb[0].mxu0
    %v196 = vadd.f32 %v113, %v195
    %v197 = vpop.f32.mrb[0].mxu0
    %v198 = vadd.f32 %v109, %v197
    %v199 = vpop.f32.mrb[0].mxu0
    %v200 = vadd.f32 %v113, %v199
    %201 = vdwg.mxu0
    %v202 = vpack.c.bf16 %v198, %v194
    %v203 = vpack.c.bf16 %v200, %v196
    %205 = vrot.lane.b32.xlu0 %v202, 64
    %v206 = vpop.permute.xlu0 %205
    %vm207 = vcmask 130048
    %v209 = vsel %vm207, %v202, 0
    %v212 = vsel %vm207, %v206, 0
    %214 = vmatprep.subr.bf16.mxu0 0
    %215 = vmatpush1.bf16.xpose.msra.mxu0 %v212
    %216 = vmatprep.subr.bf16.mxu0 0
    %217 = vmatpush1.bf16.xpose.msra.mxu0 0
    %218 = vmatprep.subr.bf16.mxu0 0
    %219 = vmatpush1.bf16.xpose.msra.mxu0 0
    %220 = vmatprep.subr.bf16.mxu0 0
    %221 = vmatpush1.bf16.xpose.msra.mxu0 0
    %222 = vmatprep.subr.bf16.mxu0 0
    %223 = vmatpush1.bf16.xpose.msra.mxu0 0
    %224 = vmatprep.subr.bf16.mxu0 0
    %225 = vmatpush1.bf16.xpose.msra.mxu0 0
    %226 = vmatprep.subr.bf16.mxu0 0
    %227 = vmatpush1.bf16.xpose.msra.mxu0 0
    %228 = vmatprep.subr.bf16.mxu0 0
    %229 = vmatpush1.bf16.xpose.msra.mxu0 0
    %230 = vmatprep.subr.bf16.mxu0 0
    %231 = vmatpush1.bf16.xpose.msra.mxu0 0
    %232 = vmatprep.subr.bf16.mxu0 0
    %233 = vmatpush1.bf16.xpose.msra.mxu0 0
    %234 = vmatprep.subr.bf16.mxu0 0
    %235 = vmatpush1.bf16.xpose.msra.mxu0 0
    %236 = vmatprep.subr.bf16.mxu0 0
    %237 = vmatpush1.bf16.xpose.msra.mxu0 0
    %238 = vmatprep.subr.bf16.mxu0 0
    %239 = vmatpush1.bf16.xpose.msra.mxu0 0
    %240 = vmatprep.subr.bf16.mxu0 0
    %241 = vmatpush1.bf16.xpose.msra.mxu0 0
    %242 = vmatprep.subr.bf16.mxu0 0
    %243 = vmatpush1.bf16.xpose.msra.mxu0 0
    %244 = vmatprep.subr.bf16.mxu0 0
    %245 = vmatpush1.bf16.xpose.msra.mxu0 0
    %246 = vmatprep.mubr.bf16.mxu0 0
    %247 = vmatmul.mubr.bf16.gmra.mrb[0].mxu0 %v209
    %v248 = vpop.f32.mrb[0].mxu0
    %v249 = vadd.f32 %v92, %v248
    %v250 = vpop.f32.mrb[0].mxu0
    %v251 = vpop.f32.mrb[0].mxu0
    %v252 = vadd.f32 %v93, %v251
    %v253 = vpop.f32.mrb[0].mxu0
    %254 = vdwg.mxu0
    %v255 = vsel %vm207, %v249, -inf
    %256 = vmax.xlane.f32.xlu0 %v255
    %v257 = vpop.xlane.xlu0 %256
    %v258 = vsel %vm207, %v252, -inf
    %259 = vmax.xlane.f32.xlu0 %v258
    %v260 = vpop.xlane.xlu0 %259
    %v261 = vsub.f32 %v249, %v257
    %v262 = vsub.f32 %v252, %v260
    %v263 = vmul.f32 %v261, 1.442695
    %v264 = vpow.pop %v263
    %v265 = vmul.f32 %v262, 1.442695
    %v266 = vpow.pop %v265
    %v267 = vsel %vm207, %v264, 0.0
    %268 = vadd.xlane.f32.xlu0 %v267
    %v269 = vpop.xlane.xlu0 %268
    %v270 = vsel %vm207, %v266, 0.0
    %271 = vadd.xlane.f32.xlu0 %v270
    %v272 = vpop.xlane.xlu0 %271
    %v273 = vrcp.pop %v269
    %v274 = vrcp.pop %v272
    %v275 = vmul.f32 %v264, %v273
    %v276 = vmul.f32 %v266, %v274
    %v277 = vpack.c.bf16 %v276, %v275
    %v279 = vsel %vm207, %v277, 0
    %281 = vmatprep.subr.bf16.mxu0 0
    %282 = vmatpush1.bf16.msra.mxu0 %v203
    %283 = vmatprep.subr.bf16.mxu0 0
    %284 = vmatpush1.bf16.msra.mxu0 0
    %285 = vmatprep.subr.bf16.mxu0 0
    %286 = vmatpush1.bf16.msra.mxu0 0
    %287 = vmatprep.subr.bf16.mxu0 0
    %288 = vmatpush1.bf16.msra.mxu0 0
    %289 = vmatprep.subr.bf16.mxu0 0
    %290 = vmatpush1.bf16.msra.mxu0 0
    %291 = vmatprep.subr.bf16.mxu0 0
    %292 = vmatpush1.bf16.msra.mxu0 0
    %293 = vmatprep.subr.bf16.mxu0 0
    %294 = vmatpush1.bf16.msra.mxu0 0
    %295 = vmatprep.subr.bf16.mxu0 0
    %296 = vmatpush1.bf16.msra.mxu0 0
    %297 = vmatprep.subr.bf16.mxu0 0
    %298 = vmatpush1.bf16.msra.mxu0 0
    %299 = vmatprep.subr.bf16.mxu0 0
    %300 = vmatpush1.bf16.msra.mxu0 0
    %301 = vmatprep.subr.bf16.mxu0 0
    %302 = vmatpush1.bf16.msra.mxu0 0
    %303 = vmatprep.subr.bf16.mxu0 0
    %304 = vmatpush1.bf16.msra.mxu0 0
    %305 = vmatprep.subr.bf16.mxu0 0
    %306 = vmatpush1.bf16.msra.mxu0 0
    %307 = vmatprep.subr.bf16.mxu0 0
    %308 = vmatpush1.bf16.msra.mxu0 0
    %309 = vmatprep.subr.bf16.mxu0 0
    %310 = vmatpush1.bf16.msra.mxu0 0
    %311 = vmatprep.subr.bf16.mxu0 0
    %312 = vmatpush1.bf16.msra.mxu0 0
    %313 = vmatprep.mubr.bf16.mxu0 0
    %314 = vmatmul.mubr.bf16.gmra.mrb[0].mxu0 %v279
    %v315 = vpop.f32.mrb[0].mxu0
    %v316 = vadd.f32 0.0, %v315
    %v317 = vpop.f32.mrb[0].mxu0
    %v318 = vpop.f32.mrb[0].mxu0
    %v319 = vadd.f32 0.0, %v318
    %v320 = vpop.f32.mrb[0].mxu0
    %321 = vdwg.mxu0
    %322 = vrot.lane.b32.xlu0 %v202, 112
    %v323 = vpop.permute.xlu0 %322
    %324 = vrot.lane.b32.xlu0 %v202, 48
    %v325 = vpop.permute.xlu0 %324
    %v327 = vsel %vm207, %v323, 0
    %v330 = vsel %vm207, %v325, 0
    %332 = vmatprep.subr.bf16.mxu0 0
    %333 = vmatpush1.bf16.xpose.msra.mxu0 %v330
    %334 = vmatprep.subr.bf16.mxu0 0
    %335 = vmatpush1.bf16.xpose.msra.mxu0 0
    %336 = vmatprep.subr.bf16.mxu0 0
    %337 = vmatpush1.bf16.xpose.msra.mxu0 0
    %338 = vmatprep.subr.bf16.mxu0 0
    %339 = vmatpush1.bf16.xpose.msra.mxu0 0
    %340 = vmatprep.subr.bf16.mxu0 0
    %341 = vmatpush1.bf16.xpose.msra.mxu0 0
    %342 = vmatprep.subr.bf16.mxu0 0
    %343 = vmatpush1.bf16.xpose.msra.mxu0 0
    %344 = vmatprep.subr.bf16.mxu0 0
    %345 = vmatpush1.bf16.xpose.msra.mxu0 0
    %346 = vmatprep.subr.bf16.mxu0 0
    %347 = vmatpush1.bf16.xpose.msra.mxu0 0
    %348 = vmatprep.subr.bf16.mxu0 0
    %349 = vmatpush1.bf16.xpose.msra.mxu0 0
    %350 = vmatprep.subr.bf16.mxu0 0
    %351 = vmatpush1.bf16.xpose.msra.mxu0 0
    %352 = vmatprep.subr.bf16.mxu0 0
    %353 = vmatpush1.bf16.xpose.msra.mxu0 0
    %354 = vmatprep.subr.bf16.mxu0 0
    %355 = vmatpush1.bf16.xpose.msra.mxu0 0
    %356 = vmatprep.subr.bf16.mxu0 0
    %357 = vmatpush1.bf16.xpose.msra.mxu0 0
    %358 = vmatprep.subr.bf16.mxu0 0
    %359 = vmatpush1.bf16.xpose.msra.mxu0 0
    %360 = vmatprep.subr.bf16.mxu0 0
    %361 = vmatpush1.bf16.xpose.msra.mxu0 0
    %362 = vmatprep.subr.bf16.mxu0 0
    %363 = vmatpush1.bf16.xpose.msra.mxu0 0
    %364 = vmatprep.mubr.bf16.mxu0 0
    %365 = vmatmul.mubr.bf16.gmra.mrb[0].mxu0 %v327
    %v366 = vpop.f32.mrb[0].mxu0
    %v367 = vadd.f32 %v92, %v366
    %v368 = vpop.f32.mrb[0].mxu0
    %v369 = vpop.f32.mrb[0].mxu0
    %v370 = vadd.f32 %v93, %v369
    %v371 = vpop.f32.mrb[0].mxu0
    %372 = vdwg.mxu0
    %v373 = vsel %vm207, %v367, -inf
    %374 = vmax.xlane.f32.xlu0 %v373
    %v375 = vpop.xlane.xlu0 %374
    %v376 = vsel %vm207, %v370, -inf
    %377 = vmax.xlane.f32.xlu0 %v376
    %v378 = vpop.xlane.xlu0 %377
    %v379 = vsub.f32 %v367, %v375
    %v380 = vsub.f32 %v370, %v378
    %v381 = vmul.f32 %v379, 1.442695
    %v382 = vpow.pop %v381
    %v383 = vmul.f32 %v380, 1.442695
    %v384 = vpow.pop %v383
    %v385 = vsel %vm207, %v382, 0.0
    %386 = vadd.xlane.f32.xlu0 %v385
    %v387 = vpop.xlane.xlu0 %386
    %v388 = vsel %vm207, %v384, 0.0
    %389 = vadd.xlane.f32.xlu0 %v388
    %v390 = vpop.xlane.xlu0 %389
    %v391 = vrcp.pop %v387
    %v392 = vrcp.pop %v390
    %v393 = vmul.f32 %v382, %v391
    %v394 = vmul.f32 %v384, %v392
    %v395 = vpack.c.bf16 %v394, %v393
    %397 = vrot.lane.b32.xlu0 %v203, 112
    %v398 = vpop.permute.xlu0 %397
    %v401 = vsel %vm207, %v395, 0
    %403 = vmatprep.subr.bf16.mxu0 0
    %404 = vmatpush1.bf16.msra.mxu0 %v398
    %405 = vmatprep.subr.bf16.mxu0 0
    %406 = vmatpush1.bf16.msra.mxu0 0
    %407 = vmatprep.subr.bf16.mxu0 0
    %408 = vmatpush1.bf16.msra.mxu0 0
    %409 = vmatprep.subr.bf16.mxu0 0
    %410 = vmatpush1.bf16.msra.mxu0 0
    %411 = vmatprep.subr.bf16.mxu0 0
    %412 = vmatpush1.bf16.msra.mxu0 0
    %413 = vmatprep.subr.bf16.mxu0 0
    %414 = vmatpush1.bf16.msra.mxu0 0
    %415 = vmatprep.subr.bf16.mxu0 0
    %416 = vmatpush1.bf16.msra.mxu0 0
    %417 = vmatprep.subr.bf16.mxu0 0
    %418 = vmatpush1.bf16.msra.mxu0 0
    %419 = vmatprep.subr.bf16.mxu0 0
    %420 = vmatpush1.bf16.msra.mxu0 0
    %421 = vmatprep.subr.bf16.mxu0 0
    %422 = vmatpush1.bf16.msra.mxu0 0
    %423 = vmatprep.subr.bf16.mxu0 0
    %424 = vmatpush1.bf16.msra.mxu0 0
    %425 = vmatprep.subr.bf16.mxu0 0
    %426 = vmatpush1.bf16.msra.mxu0 0
    %427 = vmatprep.subr.bf16.mxu0 0
    %428 = vmatpush1.bf16.msra.mxu0 0
    %429 = vmatprep.subr.bf16.mxu0 0
    %430 = vmatpush1.bf16.msra.mxu0 0
    %431 = vmatprep.subr.bf16.mxu0 0
    %432 = vmatpush1.bf16.msra.mxu0 0
    %433 = vmatprep.subr.bf16.mxu0 0
    %434 = vmatpush1.bf16.msra.mxu0 0
    %435 = vmatprep.mubr.bf16.mxu0 0
    %436 = vmatmul.mubr.bf16.gmra.mrb[0].mxu0 %v401
    %v437 = vpop.f32.mrb[0].mxu0
    %v438 = vadd.f32 0.0, %v437
    %v439 = vpop.f32.mrb[0].mxu0
    %v440 = vpop.f32.mrb[0].mxu0
    %v441 = vadd.f32 0.0, %v440
    %v442 = vpop.f32.mrb[0].mxu0
    %443 = vdwg.mxu0
    %444 = vrot.lane.b32.xlu0 %v202, 96
    %v445 = vpop.permute.xlu0 %444
    %446 = vrot.lane.b32.xlu0 %v202, 32
    %v447 = vpop.permute.xlu0 %446
    %v449 = vsel %vm207, %v445, 0
    %v452 = vsel %vm207, %v447, 0
    %454 = vmatprep.subr.bf16.mxu0 0
    %455 = vmatpush1.bf16.xpose.msra.mxu0 %v452
    %456 = vmatprep.subr.bf16.mxu0 0
    %457 = vmatpush1.bf16.xpose.msra.mxu0 0
    %458 = vmatprep.subr.bf16.mxu0 0
    %459 = vmatpush1.bf16.xpose.msra.mxu0 0
    %460 = vmatprep.subr.bf16.mxu0 0
    %461 = vmatpush1.bf16.xpose.msra.mxu0 0
    %462 = vmatprep.subr.bf16.mxu0 0
    %463 = vmatpush1.bf16.xpose.msra.mxu0 0
    %464 = vmatprep.subr.bf16.mxu0 0
    %465 = vmatpush1.bf16.xpose.msra.mxu0 0
    %466 = vmatprep.subr.bf16.mxu0 0
    %467 = vmatpush1.bf16.xpose.msra.mxu0 0
    %468 = vmatprep.subr.bf16.mxu0 0
    %469 = vmatpush1.bf16.xpose.msra.mxu0 0
    %470 = vmatprep.subr.bf16.mxu0 0
    %471 = vmatpush1.bf16.xpose.msra.mxu0 0
    %472 = vmatprep.subr.bf16.mxu0 0
    %473 = vmatpush1.bf16.xpose.msra.mxu0 0
    %474 = vmatprep.subr.bf16.mxu0 0
    %475 = vmatpush1.bf16.xpose.msra.mxu0 0
    %476 = vmatprep.subr.bf16.mxu0 0
    %477 = vmatpush1.bf16.xpose.msra.mxu0 0
    %478 = vmatprep.subr.bf16.mxu0 0
    %479 = vmatpush1.bf16.xpose.msra.mxu0 0
    %480 = vmatprep.subr.bf16.mxu0 0
    %481 = vmatpush1.bf16.xpose.msra.mxu0 0
    %482 = vmatprep.subr.bf16.mxu0 0
    %483 = vmatpush1.bf16.xpose.msra.mxu0 0
    %484 = vmatprep.subr.bf16.mxu0 0
    %485 = vmatpush1.bf16.xpose.msra.mxu0 0
    %486 = vmatprep.mubr.bf16.mxu0 0
    %487 = vmatmul.mubr.bf16.gmra.mrb[0].mxu0 %v449
    %v488 = vpop.f32.mrb[0].mxu0
    %v489 = vadd.f32 %v92, %v488
    %v490 = vpop.f32.mrb[0].mxu0
    %v491 = vpop.f32.mrb[0].mxu0
    %v492 = vadd.f32 %v93, %v491
    %v493 = vpop.f32.mrb[0].mxu0
    %494 = vdwg.mxu0
    %v495 = vsel %vm207, %v489, -inf
    %496 = vmax.xlane.f32.xlu0 %v495
    %v497 = vpop.xlane.xlu0 %496
    %v498 = vsel %vm207, %v492, -inf
    %499 = vmax.xlane.f32.xlu0 %v498
    %v500 = vpop.xlane.xlu0 %499
    %v501 = vsub.f32 %v489, %v497
    %v502 = vsub.f32 %v492, %v500
    %v503 = vmul.f32 %v501, 1.442695
    %v504 = vpow.pop %v503
    %v505 = vmul.f32 %v502, 1.442695
    %v506 = vpow.pop %v505
    %v507 = vsel %vm207, %v504, 0.0
    %508 = vadd.xlane.f32.xlu0 %v507
    %v509 = vpop.xlane.xlu0 %508
    %v510 = vsel %vm207, %v506, 0.0
    %511 = vadd.xlane.f32.xlu0 %v510
    %v512 = vpop.xlane.xlu0 %511
    %v513 = vrcp.pop %v509
    %v514 = vrcp.pop %v512
    %v515 = vmul.f32 %v504, %v513
    %v516 = vmul.f32 %v506, %v514
    %v517 = vpack.c.bf16 %v516, %v515
    %518 = vrot.lane.b32.xlu0 %v203, 96
    %v519 = vpop.permute.xlu0 %518
    %v522 = vsel %vm207, %v517, 0
    %524 = vmatprep.subr.bf16.mxu0 0
    %525 = vmatpush1.bf16.msra.mxu0 %v519
    %526 = vmatprep.subr.bf16.mxu0 0
    %527 = vmatpush1.bf16.msra.mxu0 0
    %528 = vmatprep.subr.bf16.mxu0 0
    %529 = vmatpush1.bf16.msra.mxu0 0
    %530 = vmatprep.subr.bf16.mxu0 0
    %531 = vmatpush1.bf16.msra.mxu0 0
    %532 = vmatprep.subr.bf16.mxu0 0
    %533 = vmatpush1.bf16.msra.mxu0 0
    %534 = vmatprep.subr.bf16.mxu0 0
    %535 = vmatpush1.bf16.msra.mxu0 0
    %536 = vmatprep.subr.bf16.mxu0 0
    %537 = vmatpush1.bf16.msra.mxu0 0
    %538 = vmatprep.subr.bf16.mxu0 0
    %539 = vmatpush1.bf16.msra.mxu0 0
    %540 = vmatprep.subr.bf16.mxu0 0
    %541 = vmatpush1.bf16.msra.mxu0 0
    %542 = vmatprep.subr.bf16.mxu0 0
    %543 = vmatpush1.bf16.msra.mxu0 0
    %544 = vmatprep.subr.bf16.mxu0 0
    %545 = vmatpush1.bf16.msra.mxu0 0
    %546 = vmatprep.subr.bf16.mxu0 0
    %547 = vmatpush1.bf16.msra.mxu0 0
    %548 = vmatprep.subr.bf16.mxu0 0
    %549 = vmatpush1.bf16.msra.mxu0 0
    %550 = vmatprep.subr.bf16.mxu0 0
    %551 = vmatpush1.bf16.msra.mxu0 0
    %552 = vmatprep.subr.bf16.mxu0 0
    %553 = vmatpush1.bf16.msra.mxu0 0
    %554 = vmatprep.subr.bf16.mxu0 0
    %555 = vmatpush1.bf16.msra.mxu0 0
    %556 = vmatprep.mubr.bf16.mxu0 0
    %557 = vmatmul.mubr.bf16.gmra.mrb[0].mxu0 %v522
    %v558 = vpop.f32.mrb[0].mxu0
    %v559 = vadd.f32 0.0, %v558
    %v560 = vpop.f32.mrb[0].mxu0
    %v561 = vpop.f32.mrb[0].mxu0
    %v562 = vadd.f32 0.0, %v561
    %v563 = vpop.f32.mrb[0].mxu0
    %564 = vdwg.mxu0
    %565 = vrot.lane.b32.xlu0 %v202, 80
    %v566 = vpop.permute.xlu0 %565
    %567 = vrot.lane.b32.xlu0 %v202, 16
    %v568 = vpop.permute.xlu0 %567
    %v570 = vsel %vm207, %v566, 0
    %v573 = vsel %vm207, %v568, 0
    %575 = vmatprep.subr.bf16.mxu0 0
    %576 = vmatpush1.bf16.xpose.msra.mxu0 %v573
    %577 = vmatprep.subr.bf16.mxu0 0
    %578 = vmatpush1.bf16.xpose.msra.mxu0 0
    %579 = vmatprep.subr.bf16.mxu0 0
    %580 = vmatpush1.bf16.xpose.msra.mxu0 0
    %581 = vmatprep.subr.bf16.mxu0 0
    %582 = vmatpush1.bf16.xpose.msra.mxu0 0
    %583 = vmatprep.subr.bf16.mxu0 0
    %584 = vmatpush1.bf16.xpose.msra.mxu0 0
    %585 = vmatprep.subr.bf16.mxu0 0
    %586 = vmatpush1.bf16.xpose.msra.mxu0 0
    %587 = vmatprep.subr.bf16.mxu0 0
    %588 = vmatpush1.bf16.xpose.msra.mxu0 0
    %589 = vmatprep.subr.bf16.mxu0 0
    %590 = vmatpush1.bf16.xpose.msra.mxu0 0
    %591 = vmatprep.subr.bf16.mxu0 0
    %592 = vmatpush1.bf16.xpose.msra.mxu0 0
    %593 = vmatprep.subr.bf16.mxu0 0
    %594 = vmatpush1.bf16.xpose.msra.mxu0 0
    %595 = vmatprep.subr.bf16.mxu0 0
    %596 = vmatpush1.bf16.xpose.msra.mxu0 0
    %597 = vmatprep.subr.bf16.mxu0 0
    %598 = vmatpush1.bf16.xpose.msra.mxu0 0
    %599 = vmatprep.subr.bf16.mxu0 0
    %600 = vmatpush1.bf16.xpose.msra.mxu0 0
    %601 = vmatprep.subr.bf16.mxu0 0
    %602 = vmatpush1.bf16.xpose.msra.mxu0 0
    %603 = vmatprep.subr.bf16.mxu0 0
    %604 = vmatpush1.bf16.xpose.msra.mxu0 0
    %605 = vmatprep.subr.bf16.mxu0 0
    %606 = vmatpush1.bf16.xpose.msra.mxu0 0
    %607 = vmatprep.mubr.bf16.mxu0 0
    %608 = vmatmul.mubr.bf16.gmra.mrb[0].mxu0 %v570
    %v609 = vpop.f32.mrb[0].mxu0
    %v610 = vadd.f32 %v92, %v609
    %v611 = vpop.f32.mrb[0].mxu0
    %v612 = vpop.f32.mrb[0].mxu0
    %v613 = vadd.f32 %v93, %v612
    %v614 = vpop.f32.mrb[0].mxu0
    %615 = vdwg.mxu0
    %v616 = vsel %vm207, %v610, -inf
    %617 = vmax.xlane.f32.xlu0 %v616
    %v618 = vpop.xlane.xlu0 %617
    %v619 = vsel %vm207, %v613, -inf
    %620 = vmax.xlane.f32.xlu0 %v619
    %v621 = vpop.xlane.xlu0 %620
    %v622 = vsub.f32 %v610, %v618
    %v623 = vsub.f32 %v613, %v621
    %v624 = vmul.f32 %v622, 1.442695
    %v625 = vpow.pop %v624
    %v626 = vmul.f32 %v623, 1.442695
    %v627 = vpow.pop %v626
    %v628 = vsel %vm207, %v625, 0.0
    %629 = vadd.xlane.f32.xlu0 %v628
    %v630 = vpop.xlane.xlu0 %629
    %v631 = vsel %vm207, %v627, 0.0
    %632 = vadd.xlane.f32.xlu0 %v631
    %v633 = vpop.xlane.xlu0 %632
    %v634 = vrcp.pop %v630
    %v635 = vrcp.pop %v633
    %v636 = vmul.f32 %v625, %v634
    %v637 = vmul.f32 %v627, %v635
    %v638 = vpack.c.bf16 %v637, %v636
    %639 = vrot.lane.b32.xlu0 %v203, 80
    %v640 = vpop.permute.xlu0 %639
    %v643 = vsel %vm207, %v638, 0
    %645 = vmatprep.subr.bf16.mxu0 0
    %646 = vmatpush1.bf16.msra.mxu0 %v640
    %647 = vmatprep.subr.bf16.mxu0 0
    %648 = vmatpush1.bf16.msra.mxu0 0
    %649 = vmatprep.subr.bf16.mxu0 0
    %650 = vmatpush1.bf16.msra.mxu0 0
    %651 = vmatprep.subr.bf16.mxu0 0
    %652 = vmatpush1.bf16.msra.mxu0 0
    %653 = vmatprep.subr.bf16.mxu0 0
    %654 = vmatpush1.bf16.msra.mxu0 0
    %655 = vmatprep.subr.bf16.mxu0 0
    %656 = vmatpush1.bf16.msra.mxu0 0
    %657 = vmatprep.subr.bf16.mxu0 0
    %658 = vmatpush1.bf16.msra.mxu0 0
    %659 = vmatprep.subr.bf16.mxu0 0
    %660 = vmatpush1.bf16.msra.mxu0 0
    %661 = vmatprep.subr.bf16.mxu0 0
    %662 = vmatpush1.bf16.msra.mxu0 0
    %663 = vmatprep.subr.bf16.mxu0 0
    %664 = vmatpush1.bf16.msra.mxu0 0
    %665 = vmatprep.subr.bf16.mxu0 0
    %666 = vmatpush1.bf16.msra.mxu0 0
    %667 = vmatprep.subr.bf16.mxu0 0
    %668 = vmatpush1.bf16.msra.mxu0 0
    %669 = vmatprep.subr.bf16.mxu0 0
    %670 = vmatpush1.bf16.msra.mxu0 0
    %671 = vmatprep.subr.bf16.mxu0 0
    %672 = vmatpush1.bf16.msra.mxu0 0
    %673 = vmatprep.subr.bf16.mxu0 0
    %674 = vmatpush1.bf16.msra.mxu0 0
    %675 = vmatprep.subr.bf16.mxu0 0
    %676 = vmatpush1.bf16.msra.mxu0 0
    %677 = vmatprep.mubr.bf16.mxu0 0
    %678 = vmatmul.mubr.bf16.gmra.mrb[0].mxu0 %v643
    %v679 = vpop.f32.mrb[0].mxu0
    %v680 = vadd.f32 0.0, %v679
    %v681 = vpop.f32.mrb[0].mxu0
    %v682 = vpop.f32.mrb[0].mxu0
    %v683 = vadd.f32 0.0, %v682
    %v684 = vpop.f32.mrb[0].mxu0
    %685 = vdwg.mxu0
    %688 = vrot.lane.b32.xlu0 %v438, 16
    %v689 = vpop.permute.xlu0 %688
    %690 = vrot.lane.b32.xlu0 %v441, 16
    %v691 = vpop.permute.xlu0 %690
    %696 = vrot.lane.b32.xlu0 %v559, 32
    %v697 = vpop.permute.xlu0 %696
    %698 = vrot.lane.b32.xlu0 %v562, 32
    %v699 = vpop.permute.xlu0 %698
    %704 = vrot.lane.b32.xlu0 %v680, 48
    %v705 = vpop.permute.xlu0 %704
    %706 = vrot.lane.b32.xlu0 %v683, 48
    %v707 = vpop.permute.xlu0 %706
    %v710 = vsel %vm207, %v316, %v689
    %v711 = vsel %vm207, %v319, %v691
    %vm712 = vcmask 261120
    %v713 = vsel %vm712, %v710, %v697
    %v714 = vsel %vm712, %v711, %v699
    %vm715 = vcmask 392192
    %v716 = vsel %vm715, %v713, %v705
    %v717 = vsel %vm715, %v714, %v707
    %v718 = vpack.c.bf16 %v717, %v716
    %v719 = vld [vmem:[%s5] sm:$0xf]
    %v720 = vld [vmem:[%s5 + $0x4] sm:$0xf]
    %v721 = vld [vmem:[%s5 + $0x8] sm:$0xf]
    %v722 = vld [vmem:[%s5 + $0xc] sm:$0xf]
    %v723 = vld [vmem:[%s5 + $0x10] sm:$0xf]
    %v724 = vld [vmem:[%s5 + $0x14] sm:$0xf]
    %v725 = vld [vmem:[%s5 + $0x18] sm:$0xf]
    %v726 = vld [vmem:[%s5 + $0x1c] sm:$0xf]
    %v727 = vlaneseq
    %v728 = vshrl.u32 %v727, 7
    %v729 = vsub.s32 0, %v728
    %v730 = vrot.slane %v94, %v729
    %v739 = vunpack.c.l.b16 %v719
    %v740 = vunpack.c.l.b16 %v720
    %v741 = vunpack.c.l.b16 %v721
    %v742 = vunpack.c.l.b16 %v722
    %v743 = vunpack.c.l.b16 %v723
    %v744 = vunpack.c.l.b16 %v724
    %v745 = vunpack.c.l.b16 %v725
    %v746 = vunpack.c.l.b16 %v726
    %v747 = vpack.c.b16 %v740, %v739
    %v748 = vpack.c.b16 %v742, %v741
    %v749 = vpack.c.b16 %v744, %v743
    %v750 = vpack.c.b16 %v746, %v745
    %v756 = vsel %vm52, %v718, 0
    %758 = vmatprep.subr.bf16.mxu0 0
    %759 = vmatpush1.bf16.msra.mxu0 %v747
    %760 = vmatprep.subr.bf16.mxu0 0
    %761 = vmatpush1.bf16.msra.mxu0 %v748
    %762 = vmatprep.subr.bf16.mxu0 0
    %763 = vmatpush1.bf16.msra.mxu0 %v749
    %764 = vmatprep.subr.bf16.mxu0 0
    %765 = vmatpush1.bf16.msra.mxu0 %v750
    %766 = vmatprep.subr.bf16.mxu0 0
    %767 = vmatpush1.bf16.msra.mxu0 0
    %768 = vmatprep.subr.bf16.mxu0 0
    %769 = vmatpush1.bf16.msra.mxu0 0
    %770 = vmatprep.subr.bf16.mxu0 0
    %771 = vmatpush1.bf16.msra.mxu0 0
    %772 = vmatprep.subr.bf16.mxu0 0
    %773 = vmatpush1.bf16.msra.mxu0 0
    %774 = vmatprep.subr.bf16.mxu0 0
    %775 = vmatpush1.bf16.msra.mxu0 0
    %776 = vmatprep.subr.bf16.mxu0 0
    %777 = vmatpush1.bf16.msra.mxu0 0
    %778 = vmatprep.subr.bf16.mxu0 0
    %779 = vmatpush1.bf16.msra.mxu0 0
    %780 = vmatprep.subr.bf16.mxu0 0
    %781 = vmatpush1.bf16.msra.mxu0 0
    %782 = vmatprep.subr.bf16.mxu0 0
    %783 = vmatpush1.bf16.msra.mxu0 0
    %784 = vmatprep.subr.bf16.mxu0 0
    %785 = vmatpush1.bf16.msra.mxu0 0
    %786 = vmatprep.subr.bf16.mxu0 0
    %787 = vmatpush1.bf16.msra.mxu0 0
    %788 = vmatprep.subr.bf16.mxu0 0
    %789 = vmatpush1.bf16.msra.mxu0 0
    %790 = vmatprep.mubr.bf16.mxu0 0
    %791 = vmatmul.mubr.bf16.gmra.mrb[0].mxu0 %v756
    %v792 = vpop.f32.mrb[0].mxu0
    %v793 = vadd.f32 %v730, %v792
    %v794 = vpop.f32.mrb[0].mxu0
    %v795 = vpop.f32.mrb[0].mxu0
    %v796 = vadd.f32 %v730, %v795
    %v797 = vpop.f32.mrb[0].mxu0
    %798 = vdwg.mxu0
    %v799 = vadd.f32 %v793, %v90
    %v800 = vadd.f32 %v796, %v91
    %v801 = vsel %vm52, %v799, 0.0
    %802 = vadd.xlane.f32.xlu0 %v801
    %v803 = vpop.xlane.xlu0 %802
    %v804 = vsel %vm52, %v800, 0.0
    %805 = vadd.xlane.f32.xlu0 %v804
    %v806 = vpop.xlane.xlu0 %805
    %v807 = vmul.f32 %v803, %v59
    %v808 = vmul.f32 %v806, %v59
    %v809 = vsub.f32 %v799, %v807
    %v810 = vsub.f32 %v800, %v808
    %v811 = vmul.f32 %v809, %v809
    %v812 = vmul.f32 %v810, %v810
    %v813 = vsel %vm52, %v811, 0.0
    %814 = vadd.xlane.f32.xlu0 %v813
    %v815 = vpop.xlane.xlu0 %814
    %v816 = vsel %vm52, %v812, 0.0
    %817 = vadd.xlane.f32.xlu0 %v816
    %v818 = vpop.xlane.xlu0 %817
    %v819 = vmul.f32 %v815, %v59
    %v820 = vmul.f32 %v818, %v59
    %v821 = vadd.f32 %v819, 1e-12
    %v822 = vadd.f32 %v820, 1e-12
    %v823 = vrsqrt.pop %v821
    %v824 = vrsqrt.pop %v822
    %v825 = vmul.f32 %v809, %v823
    %v826 = vmul.f32 %v810, %v824
    %v827 = vlaneseq
    %v828 = vshrl.u32 %v827, 7
    %v829 = vsub.s32 1, %v828
    %v830 = vrot.slane %v94, %v829
    %v831 = vmul.f32 %v825, %v830
    %v832 = vmul.f32 %v826, %v830
    %v833 = vlaneseq
    %v834 = vshrl.u32 %v833, 7
    %v835 = vsub.s32 2, %v834
    %v836 = vrot.slane %v94, %v835
    %v837 = vadd.f32 %v831, %v836
    %v838 = vadd.f32 %v832, %v836
    %v839 = vpack.c.bf16 %v838, %v837
    %v840 = vld [vmem:[%s6] sm:$0xf]
    %v841 = vld [vmem:[%s6 + $0x4] sm:$0xf]
    %v842 = vld [vmem:[%s6 + $0x8] sm:$0xf]
    %v843 = vld [vmem:[%s6 + $0xc] sm:$0xf]
    %v844 = vld [vmem:[%s6 + $0x10] sm:$0xf]
    %v845 = vld [vmem:[%s6 + $0x14] sm:$0xf]
    %v846 = vld [vmem:[%s6 + $0x18] sm:$0xf]
    %v847 = vld [vmem:[%s6 + $0x1c] sm:$0xf]
    %v848 = vld [vmem:[%s7] sm:$0x1]
    %v850 = vlaneseq
    %v851 = vshrl.u32 %v850, 7
    %v852 = vsub.s32 0, %v851
    %v853 = vrot.slane %v848, %v852
    %v863 = vunpack.c.l.b16 %v840
    %v864 = vunpack.c.l.b16 %v841
    %v865 = vunpack.c.l.b16 %v842
    %v866 = vunpack.c.l.b16 %v843
    %v867 = vunpack.c.l.b16 %v844
    %v868 = vunpack.c.l.b16 %v845
    %v869 = vunpack.c.l.b16 %v846
    %v870 = vunpack.c.l.b16 %v847
    %v871 = vpack.c.b16 %v864, %v863
    %v872 = vpack.c.b16 %v866, %v865
    %v873 = vpack.c.b16 %v868, %v867
    %v874 = vpack.c.b16 %v870, %v869
    %v880 = vsel %vm52, %v839, 0
    %882 = vmatprep.subr.bf16.mxu0 0
    %883 = vmatpush1.bf16.msra.mxu0 %v871
    %884 = vmatprep.subr.bf16.mxu0 0
    %885 = vmatpush1.bf16.msra.mxu0 %v872
    %886 = vmatprep.subr.bf16.mxu0 0
    %887 = vmatpush1.bf16.msra.mxu0 %v873
    %888 = vmatprep.subr.bf16.mxu0 0
    %889 = vmatpush1.bf16.msra.mxu0 %v874
    %890 = vmatprep.subr.bf16.mxu0 0
    %891 = vmatpush1.bf16.msra.mxu0 0
    %892 = vmatprep.subr.bf16.mxu0 0
    %893 = vmatpush1.bf16.msra.mxu0 0
    %894 = vmatprep.subr.bf16.mxu0 0
    %895 = vmatpush1.bf16.msra.mxu0 0
    %896 = vmatprep.subr.bf16.mxu0 0
    %897 = vmatpush1.bf16.msra.mxu0 0
    %898 = vmatprep.subr.bf16.mxu0 0
    %899 = vmatpush1.bf16.msra.mxu0 0
    %900 = vmatprep.subr.bf16.mxu0 0
    %901 = vmatpush1.bf16.msra.mxu0 0
    %902 = vmatprep.subr.bf16.mxu0 0
    %903 = vmatpush1.bf16.msra.mxu0 0
    %904 = vmatprep.subr.bf16.mxu0 0
    %905 = vmatpush1.bf16.msra.mxu0 0
    %906 = vmatprep.subr.bf16.mxu0 0
    %907 = vmatpush1.bf16.msra.mxu0 0
    %908 = vmatprep.subr.bf16.mxu0 0
    %909 = vmatpush1.bf16.msra.mxu0 0
    %910 = vmatprep.subr.bf16.mxu0 0
    %911 = vmatpush1.bf16.msra.mxu0 0
    %912 = vmatprep.subr.bf16.mxu0 0
    %913 = vmatpush1.bf16.msra.mxu0 0
    %914 = vmatprep.mubr.bf16.mxu0 0
    %915 = vmatmul.mubr.bf16.gmra.mrb[0].mxu0 %v880
    %v916 = vpop.f32.mrb[0].mxu0
    %v917 = vadd.f32 %v853, %v916
    %v918 = vpop.f32.mrb[0].mxu0
    %v919 = vpop.f32.mrb[0].mxu0
    %v920 = vadd.f32 %v853, %v919
    %v921 = vpop.f32.mrb[0].mxu0
    %922 = vdwg.mxu0
    %v923 = vmul.f32 %v917, %v917
    %v924 = vmul.f32 %v920, %v920
    %v925 = vmul.f32 %v917, %v923
    %v926 = vmul.f32 %v920, %v924
    %v927 = vmul.f32 %v925, 0.044715
    %v928 = vmul.f32 %v926, 0.044715
    %v929 = vadd.f32 %v917, %v927
    %v930 = vadd.f32 %v920, %v928
    %v931 = vmul.f32 %v929, 0.7978846
    %v932 = vmul.f32 %v930, 0.7978846
    %v933 = vtanh.pop %v931
    %v934 = vtanh.pop %v932
    %v935 = vadd.f32 %v933, 1.0
    %v936 = vadd.f32 %v934, 1.0
    %v937 = vmul.f32 %v935, 0.5
    %v938 = vmul.f32 %v936, 0.5
    %v939 = vmul.f32 %v917, %v937
    %v940 = vmul.f32 %v920, %v938
    %v941 = vpack.c.bf16 %v940, %v939
    %v942 = vld [vmem:[%s8] sm:$0xf]
    %v943 = vld [vmem:[%s8 + $0x4] sm:$0xf]
    %v944 = vld [vmem:[%s8 + $0x8] sm:$0xf]
    %v945 = vld [vmem:[%s8 + $0xc] sm:$0xf]
    %v946 = vld [vmem:[%s8 + $0x10] sm:$0xf]
    %v947 = vld [vmem:[%s8 + $0x14] sm:$0xf]
    %v948 = vld [vmem:[%s8 + $0x18] sm:$0xf]
    %v949 = vld [vmem:[%s8 + $0x1c] sm:$0xf]
    %v950 = vld [vmem:[%s8 + $0x20] sm:$0xf]
    %v951 = vld [vmem:[%s8 + $0x24] sm:$0xf]
    %v952 = vld [vmem:[%s8 + $0x28] sm:$0xf]
    %v953 = vld [vmem:[%s8 + $0x2c] sm:$0xf]
    %v954 = vld [vmem:[%s8 + $0x30] sm:$0xf]
    %v955 = vld [vmem:[%s8 + $0x34] sm:$0xf]
    %v956 = vld [vmem:[%s8 + $0x38] sm:$0xf]
    %v957 = vld [vmem:[%s8 + $0x3c] sm:$0xf]
    %v958 = vlaneseq
    %v959 = vshrl.u32 %v958, 7
    %v960 = vsub.s32 3, %v959
    %v961 = vrot.slane %v94, %v960
    %v978 = vunpack.c.l.b16 %v942
    %v979 = vunpack.c.l.b16 %v943
    %v980 = vunpack.c.l.b16 %v944
    %v981 = vunpack.c.l.b16 %v945
    %v982 = vunpack.c.l.b16 %v946
    %v983 = vunpack.c.l.b16 %v947
    %v984 = vunpack.c.l.b16 %v948
    %v985 = vunpack.c.l.b16 %v949
    %v986 = vunpack.c.l.b16 %v950
    %v987 = vunpack.c.l.b16 %v951
    %v988 = vunpack.c.l.b16 %v952
    %v989 = vunpack.c.l.b16 %v953
    %v990 = vunpack.c.l.b16 %v954
    %v991 = vunpack.c.l.b16 %v955
    %v992 = vunpack.c.l.b16 %v956
    %v993 = vunpack.c.l.b16 %v957
    %v994 = vpack.c.b16 %v979, %v978
    %v995 = vpack.c.b16 %v981, %v980
    %v996 = vpack.c.b16 %v983, %v982
    %v997 = vpack.c.b16 %v985, %v984
    %v998 = vpack.c.b16 %v987, %v986
    %v999 = vpack.c.b16 %v989, %v988
    %v1000 = vpack.c.b16 %v991, %v990
    %v1001 = vpack.c.b16 %v993, %v992
    %1010 = vmatprep.subr.bf16.mxu0 0
    %1011 = vmatpush1.bf16.msra.mxu0 %v994
    %1012 = vmatprep.subr.bf16.mxu0 0
    %1013 = vmatpush1.bf16.msra.mxu0 %v995
    %1014 = vmatprep.subr.bf16.mxu0 0
    %1015 = vmatpush1.bf16.msra.mxu0 %v996
    %1016 = vmatprep.subr.bf16.mxu0 0
    %1017 = vmatpush1.bf16.msra.mxu0 %v997
    %1018 = vmatprep.subr.bf16.mxu0 0
    %1019 = vmatpush1.bf16.msra.mxu0 %v998
    %1020 = vmatprep.subr.bf16.mxu0 0
    %1021 = vmatpush1.bf16.msra.mxu0 %v999
    %1022 = vmatprep.subr.bf16.mxu0 0
    %1023 = vmatpush1.bf16.msra.mxu0 %v1000
    %1024 = vmatprep.subr.bf16.mxu0 0
    %1025 = vmatpush1.bf16.msra.mxu0 %v1001
    %1026 = vmatprep.subr.bf16.mxu0 0
    %1027 = vmatpush1.bf16.msra.mxu0 0
    %1028 = vmatprep.subr.bf16.mxu0 0
    %1029 = vmatpush1.bf16.msra.mxu0 0
    %1030 = vmatprep.subr.bf16.mxu0 0
    %1031 = vmatpush1.bf16.msra.mxu0 0
    %1032 = vmatprep.subr.bf16.mxu0 0
    %1033 = vmatpush1.bf16.msra.mxu0 0
    %1034 = vmatprep.subr.bf16.mxu0 0
    %1035 = vmatpush1.bf16.msra.mxu0 0
    %1036 = vmatprep.subr.bf16.mxu0 0
    %1037 = vmatpush1.bf16.msra.mxu0 0
    %1038 = vmatprep.subr.bf16.mxu0 0
    %1039 = vmatpush1.bf16.msra.mxu0 0
    %1040 = vmatprep.subr.bf16.mxu0 0
    %1041 = vmatpush1.bf16.msra.mxu0 0
    %1042 = vmatprep.mubr.bf16.mxu0 0
    %1043 = vmatmul.mubr.bf16.gmra.mrb[0].mxu0 %v941
    %v1044 = vpop.f32.mrb[0].mxu0
    %v1045 = vadd.f32 %v961, %v1044
    %v1046 = vpop.f32.mrb[0].mxu0
    %v1047 = vpop.f32.mrb[0].mxu0
    %v1048 = vadd.f32 %v961, %v1047
    %v1049 = vpop.f32.mrb[0].mxu0
    %1050 = vdwg.mxu0
    %v1051 = vadd.f32 %v1045, %v837
    %v1052 = vadd.f32 %v1048, %v838
    %v1053 = vsel %vm52, %v1051, 0.0
    %1054 = vadd.xlane.f32.xlu0 %v1053
    %v1055 = vpop.xlane.xlu0 %1054
    %v1056 = vsel %vm52, %v1052, 0.0
    %1057 = vadd.xlane.f32.xlu0 %v1056
    %v1058 = vpop.xlane.xlu0 %1057
    %v1059 = vmul.f32 %v1055, %v59
    %v1060 = vmul.f32 %v1058, %v59
    %v1061 = vsub.f32 %v1051, %v1059
    %v1062 = vsub.f32 %v1052, %v1060
    %v1063 = vmul.f32 %v1061, %v1061
    %v1064 = vmul.f32 %v1062, %v1062
    %v1065 = vsel %vm52, %v1063, 0.0
    %1066 = vadd.xlane.f32.xlu0 %v1065
    %v1067 = vpop.xlane.xlu0 %1066
    %v1068 = vsel %vm52, %v1064, 0.0
    %1069 = vadd.xlane.f32.xlu0 %v1068
    %v1070 = vpop.xlane.xlu0 %1069
    %v1071 = vmul.f32 %v1067, %v59
    %v1072 = vmul.f32 %v1070, %v59
    %v1073 = vadd.f32 %v1071, 1e-12
    %v1074 = vadd.f32 %v1072, 1e-12
    %v1075 = vrsqrt.pop %v1073
    %v1076 = vrsqrt.pop %v1074
    %v1077 = vmul.f32 %v1061, %v1075
    %v1078 = vmul.f32 %v1062, %v1076
    %v1079 = vlaneseq
    %v1080 = vshrl.u32 %v1079, 7
    %v1081 = vsub.s32 4, %v1080
    %v1082 = vrot.slane %v94, %v1081
    %v1083 = vmul.f32 %v1077, %v1082
    %v1084 = vmul.f32 %v1078, %v1082
    %v1085 = vlaneseq
    %v1086 = vshrl.u32 %v1085, 7
    %v1087 = vsub.s32 5, %v1086
    %v1088 = vrot.slane %v94, %v1087
    %v1089 = vadd.f32 %v1083, %v1088
    %v1090 = vadd.f32 %v1084, %v1088
    %s1091 = scalar_lea.vmem %s9, 8
    %v1092 = vld [vmem:[%s1091] sm:$0x3f]
    %v1093 = vpack.c.bf16 %v1090, %v1089
    %s1094 = scalar_lea.vmem %s3, 64
    %v1095 = vld [vmem:[%s1094] sm:$0xff]
    %v1096 = vld [vmem:[%s1094 + $0x8] sm:$0xff]
    %v1097 = vld [vmem:[%s1094 + $0x10] sm:$0xff]
    %v1098 = vld [vmem:[%s1094 + $0x18] sm:$0xff]
    %v1099 = vld [vmem:[%s1094 + $0x20] sm:$0xff]
    %v1100 = vld [vmem:[%s1094 + $0x28] sm:$0xff]
    %v1101 = vld [vmem:[%s1094 + $0x30] sm:$0xff]
    %v1102 = vld [vmem:[%s1094 + $0x38] sm:$0xff]
    %s1103 = scalar_lea.vmem %s4, 2
    %v1104 = vld [vmem:[%s1103] sm:$0x3]
    %v1106 = vlaneseq
    %v1107 = vshrl.u32 %v1106, 7
    %v1108 = vsub.s32 0, %v1107
    %v1109 = vrot.slane %v1104, %v1108
    %v1110 = vlaneseq
    %v1111 = vshrl.u32 %v1110, 7
    %v1112 = vsub.s32 1, %v1111
    %v1113 = vrot.slane %v1104, %v1112
    %v1124 = vunpack.c.l.b16 %v1095
    %v1125 = vunpack.c.h.b16 %v1095
    %v1126 = vunpack.c.l.b16 %v1096
    %v1127 = vunpack.c.h.b16 %v1096
    %v1128 = vunpack.c.l.b16 %v1097
    %v1129 = vunpack.c.h.b16 %v1097
    %v1130 = vunpack.c.l.b16 %v1098
    %v1131 = vunpack.c.h.b16 %v1098
    %v1132 = vunpack.c.l.b16 %v1099
    %v1133 = vunpack.c.h.b16 %v1099
    %v1134 = vunpack.c.l.b16 %v1100
    %v1135 = vunpack.c.h.b16 %v1100
    %v1136 = vunpack.c.l.b16 %v1101
    %v1137 = vunpack.c.h.b16 %v1101
    %v1138 = vunpack.c.l.b16 %v1102
    %v1139 = vunpack.c.h.b16 %v1102
    %v1140 = vpack.c.b16 %v1126, %v1124
    %v1141 = vpack.c.b16 %v1127, %v1125
    %v1142 = vpack.c.b16 %v1130, %v1128
    %v1143 = vpack.c.b16 %v1131, %v1129
    %v1144 = vpack.c.b16 %v1134, %v1132
    %v1145 = vpack.c.b16 %v1135, %v1133
    %v1146 = vpack.c.b16 %v1138, %v1136
    %v1147 = vpack.c.b16 %v1139, %v1137
    %v1157 = vsel %vm52, %v1093, 0
    %1159 = vmatprep.subr.bf16.mxu0 %v1141
    %1160 = vmatpush1.bf16.msra.mxu0 %v1140
    %1161 = vmatprep.subr.bf16.mxu0 %v1143
    %1162 = vmatpush1.bf16.msra.mxu0 %v1142
    %1163 = vmatprep.subr.bf16.mxu0 %v1145
    %1164 = vmatpush1.bf16.msra.mxu0 %v1144
    %1165 = vmatprep.subr.bf16.mxu0 %v1147
    %1166 = vmatpush1.bf16.msra.mxu0 %v1146
    %1167 = vmatprep.subr.bf16.mxu0 0
    %1168 = vmatpush1.bf16.msra.mxu0 0
    %1169 = vmatprep.subr.bf16.mxu0 0
    %1170 = vmatpush1.bf16.msra.mxu0 0
    %1171 = vmatprep.subr.bf16.mxu0 0
    %1172 = vmatpush1.bf16.msra.mxu0 0
    %1173 = vmatprep.subr.bf16.mxu0 0
    %1174 = vmatpush1.bf16.msra.mxu0 0
    %1175 = vmatprep.subr.bf16.mxu0 0
    %1176 = vmatpush1.bf16.msra.mxu0 0
    %1177 = vmatprep.subr.bf16.mxu0 0
    %1178 = vmatpush1.bf16.msra.mxu0 0
    %1179 = vmatprep.subr.bf16.mxu0 0
    %1180 = vmatpush1.bf16.msra.mxu0 0
    %1181 = vmatprep.subr.bf16.mxu0 0
    %1182 = vmatpush1.bf16.msra.mxu0 0
    %1183 = vmatprep.subr.bf16.mxu0 0
    %1184 = vmatpush1.bf16.msra.mxu0 0
    %1185 = vmatprep.subr.bf16.mxu0 0
    %1186 = vmatpush1.bf16.msra.mxu0 0
    %1187 = vmatprep.subr.bf16.mxu0 0
    %1188 = vmatpush1.bf16.msra.mxu0 0
    %1189 = vmatprep.subr.bf16.mxu0 0
    %1190 = vmatpush1.bf16.msra.mxu0 0
    %1191 = vmatprep.mubr.bf16.mxu0 0
    %1192 = vmatmul.mubr.bf16.gmra.mrb[0].mxu0 %v1157
    %v1193 = vpop.f32.mrb[0].mxu0
    %v1194 = vadd.f32 %v1109, %v1193
    %v1195 = vpop.f32.mrb[0].mxu0
    %v1196 = vadd.f32 %v1113, %v1195
    %v1197 = vpop.f32.mrb[0].mxu0
    %v1198 = vadd.f32 %v1109, %v1197
    %v1199 = vpop.f32.mrb[0].mxu0
    %v1200 = vadd.f32 %v1113, %v1199
    %1201 = vdwg.mxu0
    %v1202 = vpack.c.bf16 %v1198, %v1194
    %v1203 = vpack.c.bf16 %v1200, %v1196
    %1205 = vrot.lane.b32.xlu0 %v1202, 64
    %v1206 = vpop.permute.xlu0 %1205
    %v1208 = vsel %vm207, %v1202, 0
    %v1211 = vsel %vm207, %v1206, 0
    %1213 = vmatprep.subr.bf16.mxu0 0
    %1214 = vmatpush1.bf16.xpose.msra.mxu0 %v1211
    %1215 = vmatprep.subr.bf16.mxu0 0
    %1216 = vmatpush1.bf16.xpose.msra.mxu0 0
    %1217 = vmatprep.subr.bf16.mxu0 0
    %1218 = vmatpush1.bf16.xpose.msra.mxu0 0
    %1219 = vmatprep.subr.bf16.mxu0 0
    %1220 = vmatpush1.bf16.xpose.msra.mxu0 0
    %1221 = vmatprep.subr.bf16.mxu0 0
    %1222 = vmatpush1.bf16.xpose.msra.mxu0 0
    %1223 = vmatprep.subr.bf16.mxu0 0
    %1224 = vmatpush1.bf16.xpose.msra.mxu0 0
    %1225 = vmatprep.subr.bf16.mxu0 0
    %1226 = vmatpush1.bf16.xpose.msra.mxu0 0
    %1227 = vmatprep.subr.bf16.mxu0 0
    %1228 = vmatpush1.bf16.xpose.msra.mxu0 0
    %1229 = vmatprep.subr.bf16.mxu0 0
    %1230 = vmatpush1.bf16.xpose.msra.mxu0 0
    %1231 = vmatprep.subr.bf16.mxu0 0
    %1232 = vmatpush1.bf16.xpose.msra.mxu0 0
    %1233 = vmatprep.subr.bf16.mxu0 0
    %1234 = vmatpush1.bf16.xpose.msra.mxu0 0
    %1235 = vmatprep.subr.bf16.mxu0 0
    %1236 = vmatpush1.bf16.xpose.msra.mxu0 0
    %1237 = vmatprep.subr.bf16.mxu0 0
    %1238 = vmatpush1.bf16.xpose.msra.mxu0 0
    %1239 = vmatprep.subr.bf16.mxu0 0
    %1240 = vmatpush1.bf16.xpose.msra.mxu0 0
    %1241 = vmatprep.subr.bf16.mxu0 0
    %1242 = vmatpush1.bf16.xpose.msra.mxu0 0
    %1243 = vmatprep.subr.bf16.mxu0 0
    %1244 = vmatpush1.bf16.xpose.msra.mxu0 0
    %1245 = vmatprep.mubr.bf16.mxu0 0
    %1246 = vmatmul.mubr.bf16.gmra.mrb[0].mxu0 %v1208
    %v1247 = vpop.f32.mrb[0].mxu0
    %v1248 = vadd.f32 %v92, %v1247
    %v1249 = vpop.f32.mrb[0].mxu0
    %v1250 = vpop.f32.mrb[0].mxu0
    %v1251 = vadd.f32 %v93, %v1250
    %v1252 = vpop.f32.mrb[0].mxu0
    %1253 = vdwg.mxu0
    %v1254 = vsel %vm207, %v1248, -inf
    %1255 = vmax.xlane.f32.xlu0 %v1254
    %v1256 = vpop.xlane.xlu0 %1255
    %v1257 = vsel %vm207, %v1251, -inf
    %1258 = vmax.xlane.f32.xlu0 %v1257
    %v1259 = vpop.xlane.xlu0 %1258
    %v1260 = vsub.f32 %v1248, %v1256
    %v1261 = vsub.f32 %v1251, %v1259
    %v1262 = vmul.f32 %v1260, 1.442695
    %v1263 = vpow.pop %v1262
    %v1264 = vmul.f32 %v1261, 1.442695
    %v1265 = vpow.pop %v1264
    %v1266 = vsel %vm207, %v1263, 0.0
    %1267 = vadd.xlane.f32.xlu0 %v1266
    %v1268 = vpop.xlane.xlu0 %1267
    %v1269 = vsel %vm207, %v1265, 0.0
    %1270 = vadd.xlane.f32.xlu0 %v1269
    %v1271 = vpop.xlane.xlu0 %1270
    %v1272 = vrcp.pop %v1268
    %v1273 = vrcp.pop %v1271
    %v1274 = vmul.f32 %v1263, %v1272
    %v1275 = vmul.f32 %v1265, %v1273
    %v1276 = vpack.c.bf16 %v1275, %v1274
    %v1278 = vsel %vm207, %v1276, 0
    %1280 = vmatprep.subr.bf16.mxu0 0
    %1281 = vmatpush1.bf16.msra.mxu0 %v1203
    %1282 = vmatprep.subr.bf16.mxu0 0
    %1283 = vmatpush1.bf16.msra.mxu0 0
    %1284 = vmatprep.subr.bf16.mxu0 0
    %1285 = vmatpush1.bf16.msra.mxu0 0
    %1286 = vmatprep.subr.bf16.mxu0 0
    %1287 = vmatpush1.bf16.msra.mxu0 0
    %1288 = vmatprep.subr.bf16.mxu0 0
    %1289 = vmatpush1.bf16.msra.mxu0 0
    %1290 = vmatprep.subr.bf16.mxu0 0
    %1291 = vmatpush1.bf16.msra.mxu0 0
    %1292 = vmatprep.subr.bf16.mxu0 0
    %1293 = vmatpush1.bf16.msra.mxu0 0
    %1294 = vmatprep.subr.bf16.mxu0 0
    %1295 = vmatpush1.bf16.msra.mxu0 0
    %1296 = vmatprep.subr.bf16.mxu0 0
    %1297 = vmatpush1.bf16.msra.mxu0 0
    %1298 = vmatprep.subr.bf16.mxu0 0
    %1299 = vmatpush1.bf16.msra.mxu0 0
    %1300 = vmatprep.subr.bf16.mxu0 0
    %1301 = vmatpush1.bf16.msra.mxu0 0
    %1302 = vmatprep.subr.bf16.mxu0 0
    %1303 = vmatpush1.bf16.msra.mxu0 0
    %1304 = vmatprep.subr.bf16.mxu0 0
    %1305 = vmatpush1.bf16.msra.mxu0 0
    %1306 = vmatprep.subr.bf16.mxu0 0
    %1307 = vmatpush1.bf16.msra.mxu0 0
    %1308 = vmatprep.subr.bf16.mxu0 0
    %1309 = vmatpush1.bf16.msra.mxu0 0
    %1310 = vmatprep.subr.bf16.mxu0 0
    %1311 = vmatpush1.bf16.msra.mxu0 0
    %1312 = vmatprep.mubr.bf16.mxu0 0
    %1313 = vmatmul.mubr.bf16.gmra.mrb[0].mxu0 %v1278
    %v1314 = vpop.f32.mrb[0].mxu0
    %v1315 = vadd.f32 0.0, %v1314
    %v1316 = vpop.f32.mrb[0].mxu0
    %v1317 = vpop.f32.mrb[0].mxu0
    %v1318 = vadd.f32 0.0, %v1317
    %v1319 = vpop.f32.mrb[0].mxu0
    %1320 = vdwg.mxu0
    %1321 = vrot.lane.b32.xlu0 %v1202, 112
    %v1322 = vpop.permute.xlu0 %1321
    %1323 = vrot.lane.b32.xlu0 %v1202, 48
    %v1324 = vpop.permute.xlu0 %1323
    %v1326 = vsel %vm207, %v1322, 0
    %v1329 = vsel %vm207, %v1324, 0
    %1331 = vmatprep.subr.bf16.mxu0 0
    %1332 = vmatpush1.bf16.xpose.msra.mxu0 %v1329
    %1333 = vmatprep.subr.bf16.mxu0 0
    %1334 = vmatpush1.bf16.xpose.msra.mxu0 0
    %1335 = vmatprep.subr.bf16.mxu0 0
    %1336 = vmatpush1.bf16.xpose.msra.mxu0 0
    %1337 = vmatprep.subr.bf16.mxu0 0
    %1338 = vmatpush1.bf16.xpose.msra.mxu0 0
    %1339 = vmatprep.subr.bf16.mxu0 0
    %1340 = vmatpush1.bf16.xpose.msra.mxu0 0
    %1341 = vmatprep.subr.bf16.mxu0 0
    %1342 = vmatpush1.bf16.xpose.msra.mxu0 0
    %1343 = vmatprep.subr.bf16.mxu0 0
    %1344 = vmatpush1.bf16.xpose.msra.mxu0 0
    %1345 = vmatprep.subr.bf16.mxu0 0
    %1346 = vmatpush1.bf16.xpose.msra.mxu0 0
    %1347 = vmatprep.subr.bf16.mxu0 0
    %1348 = vmatpush1.bf16.xpose.msra.mxu0 0
    %1349 = vmatprep.subr.bf16.mxu0 0
    %1350 = vmatpush1.bf16.xpose.msra.mxu0 0
    %1351 = vmatprep.subr.bf16.mxu0 0
    %1352 = vmatpush1.bf16.xpose.msra.mxu0 0
    %1353 = vmatprep.subr.bf16.mxu0 0
    %1354 = vmatpush1.bf16.xpose.msra.mxu0 0
    %1355 = vmatprep.subr.bf16.mxu0 0
    %1356 = vmatpush1.bf16.xpose.msra.mxu0 0
    %1357 = vmatprep.subr.bf16.mxu0 0
    %1358 = vmatpush1.bf16.xpose.msra.mxu0 0
    %1359 = vmatprep.subr.bf16.mxu0 0
    %1360 = vmatpush1.bf16.xpose.msra.mxu0 0
    %1361 = vmatprep.subr.bf16.mxu0 0
    %1362 = vmatpush1.bf16.xpose.msra.mxu0 0
    %1363 = vmatprep.mubr.bf16.mxu0 0
    %1364 = vmatmul.mubr.bf16.gmra.mrb[0].mxu0 %v1326
    %v1365 = vpop.f32.mrb[0].mxu0
    %v1366 = vadd.f32 %v92, %v1365
    %v1367 = vpop.f32.mrb[0].mxu0
    %v1368 = vpop.f32.mrb[0].mxu0
    %v1369 = vadd.f32 %v93, %v1368
    %v1370 = vpop.f32.mrb[0].mxu0
    %1371 = vdwg.mxu0
    %v1372 = vsel %vm207, %v1366, -inf
    %1373 = vmax.xlane.f32.xlu0 %v1372
    %v1374 = vpop.xlane.xlu0 %1373
    %v1375 = vsel %vm207, %v1369, -inf
    %1376 = vmax.xlane.f32.xlu0 %v1375
    %v1377 = vpop.xlane.xlu0 %1376
    %v1378 = vsub.f32 %v1366, %v1374
    %v1379 = vsub.f32 %v1369, %v1377
    %v1380 = vmul.f32 %v1378, 1.442695
    %v1381 = vpow.pop %v1380
    %v1382 = vmul.f32 %v1379, 1.442695
    %v1383 = vpow.pop %v1382
    %v1384 = vsel %vm207, %v1381, 0.0
    %1385 = vadd.xlane.f32.xlu0 %v1384
    %v1386 = vpop.xlane.xlu0 %1385
    %v1387 = vsel %vm207, %v1383, 0.0
    %1388 = vadd.xlane.f32.xlu0 %v1387
    %v1389 = vpop.xlane.xlu0 %1388
    %v1390 = vrcp.pop %v1386
    %v1391 = vrcp.pop %v1389
    %v1392 = vmul.f32 %v1381, %v1390
    %v1393 = vmul.f32 %v1383, %v1391
    %v1394 = vpack.c.bf16 %v1393, %v1392
    %1396 = vrot.lane.b32.xlu0 %v1203, 112
    %v1397 = vpop.permute.xlu0 %1396
    %v1400 = vsel %vm207, %v1394, 0
    %1402 = vmatprep.subr.bf16.mxu0 0
    %1403 = vmatpush1.bf16.msra.mxu0 %v1397
    %1404 = vmatprep.subr.bf16.mxu0 0
    %1405 = vmatpush1.bf16.msra.mxu0 0
    %1406 = vmatprep.subr.bf16.mxu0 0
    %1407 = vmatpush1.bf16.msra.mxu0 0
    %1408 = vmatprep.subr.bf16.mxu0 0
    %1409 = vmatpush1.bf16.msra.mxu0 0
    %1410 = vmatprep.subr.bf16.mxu0 0
    %1411 = vmatpush1.bf16.msra.mxu0 0
    %1412 = vmatprep.subr.bf16.mxu0 0
    %1413 = vmatpush1.bf16.msra.mxu0 0
    %1414 = vmatprep.subr.bf16.mxu0 0
    %1415 = vmatpush1.bf16.msra.mxu0 0
    %1416 = vmatprep.subr.bf16.mxu0 0
    %1417 = vmatpush1.bf16.msra.mxu0 0
    %1418 = vmatprep.subr.bf16.mxu0 0
    %1419 = vmatpush1.bf16.msra.mxu0 0
    %1420 = vmatprep.subr.bf16.mxu0 0
    %1421 = vmatpush1.bf16.msra.mxu0 0
    %1422 = vmatprep.subr.bf16.mxu0 0
    %1423 = vmatpush1.bf16.msra.mxu0 0
    %1424 = vmatprep.subr.bf16.mxu0 0
    %1425 = vmatpush1.bf16.msra.mxu0 0
    %1426 = vmatprep.subr.bf16.mxu0 0
    %1427 = vmatpush1.bf16.msra.mxu0 0
    %1428 = vmatprep.subr.bf16.mxu0 0
    %1429 = vmatpush1.bf16.msra.mxu0 0
    %1430 = vmatprep.subr.bf16.mxu0 0
    %1431 = vmatpush1.bf16.msra.mxu0 0
    %1432 = vmatprep.subr.bf16.mxu0 0
    %1433 = vmatpush1.bf16.msra.mxu0 0
    %1434 = vmatprep.mubr.bf16.mxu0 0
    %1435 = vmatmul.mubr.bf16.gmra.mrb[0].mxu0 %v1400
    %v1436 = vpop.f32.mrb[0].mxu0
    %v1437 = vadd.f32 0.0, %v1436
    %v1438 = vpop.f32.mrb[0].mxu0
    %v1439 = vpop.f32.mrb[0].mxu0
    %v1440 = vadd.f32 0.0, %v1439
    %v1441 = vpop.f32.mrb[0].mxu0
    %1442 = vdwg.mxu0
    %1443 = vrot.lane.b32.xlu0 %v1202, 96
    %v1444 = vpop.permute.xlu0 %1443
    %1445 = vrot.lane.b32.xlu0 %v1202, 32
    %v1446 = vpop.permute.xlu0 %1445
    %v1448 = vsel %vm207, %v1444, 0
    %v1451 = vsel %vm207, %v1446, 0
    %1453 = vmatprep.subr.bf16.mxu0 0
    %1454 = vmatpush1.bf16.xpose.msra.mxu0 %v1451
    %1455 = vmatprep.subr.bf16.mxu0 0
    %1456 = vmatpush1.bf16.xpose.msra.mxu0 0
    %1457 = vmatprep.subr.bf16.mxu0 0
    %1458 = vmatpush1.bf16.xpose.msra.mxu0 0
    %1459 = vmatprep.subr.bf16.mxu0 0
    %1460 = vmatpush1.bf16.xpose.msra.mxu0 0
    %1461 = vmatprep.subr.bf16.mxu0 0
    %1462 = vmatpush1.bf16.xpose.msra.mxu0 0
    %1463 = vmatprep.subr.bf16.mxu0 0
    %1464 = vmatpush1.bf16.xpose.msra.mxu0 0
    %1465 = vmatprep.subr.bf16.mxu0 0
    %1466 = vmatpush1.bf16.xpose.msra.mxu0 0
    %1467 = vmatprep.subr.bf16.mxu0 0
    %1468 = vmatpush1.bf16.xpose.msra.mxu0 0
    %1469 = vmatprep.subr.bf16.mxu0 0
    %1470 = vmatpush1.bf16.xpose.msra.mxu0 0
    %1471 = vmatprep.subr.bf16.mxu0 0
    %1472 = vmatpush1.bf16.xpose.msra.mxu0 0
    %1473 = vmatprep.subr.bf16.mxu0 0
    %1474 = vmatpush1.bf16.xpose.msra.mxu0 0
    %1475 = vmatprep.subr.bf16.mxu0 0
    %1476 = vmatpush1.bf16.xpose.msra.mxu0 0
    %1477 = vmatprep.subr.bf16.mxu0 0
    %1478 = vmatpush1.bf16.xpose.msra.mxu0 0
    %1479 = vmatprep.subr.bf16.mxu0 0
    %1480 = vmatpush1.bf16.xpose.msra.mxu0 0
    %1481 = vmatprep.subr.bf16.mxu0 0
    %1482 = vmatpush1.bf16.xpose.msra.mxu0 0
    %1483 = vmatprep.subr.bf16.mxu0 0
    %1484 = vmatpush1.bf16.xpose.msra.mxu0 0
    %1485 = vmatprep.mubr.bf16.mxu0 0
    %1486 = vmatmul.mubr.bf16.gmra.mrb[0].mxu0 %v1448
    %v1487 = vpop.f32.mrb[0].mxu0
    %v1488 = vadd.f32 %v92, %v1487
    %v1489 = vpop.f32.mrb[0].mxu0
    %v1490 = vpop.f32.mrb[0].mxu0
    %v1491 = vadd.f32 %v93, %v1490
    %v1492 = vpop.f32.mrb[0].mxu0
    %1493 = vdwg.mxu0
    %v1494 = vsel %vm207, %v1488, -inf
    %1495 = vmax.xlane.f32.xlu0 %v1494
    %v1496 = vpop.xlane.xlu0 %1495
    %v1497 = vsel %vm207, %v1491, -inf
    %1498 = vmax.xlane.f32.xlu0 %v1497
    %v1499 = vpop.xlane.xlu0 %1498
    %v1500 = vsub.f32 %v1488, %v1496
    %v1501 = vsub.f32 %v1491, %v1499
    %v1502 = vmul.f32 %v1500, 1.442695
    %v1503 = vpow.pop %v1502
    %v1504 = vmul.f32 %v1501, 1.442695
    %v1505 = vpow.pop %v1504
    %v1506 = vsel %vm207, %v1503, 0.0
    %1507 = vadd.xlane.f32.xlu0 %v1506
    %v1508 = vpop.xlane.xlu0 %1507
    %v1509 = vsel %vm207, %v1505, 0.0
    %1510 = vadd.xlane.f32.xlu0 %v1509
    %v1511 = vpop.xlane.xlu0 %1510
    %v1512 = vrcp.pop %v1508
    %v1513 = vrcp.pop %v1511
    %v1514 = vmul.f32 %v1503, %v1512
    %v1515 = vmul.f32 %v1505, %v1513
    %v1516 = vpack.c.bf16 %v1515, %v1514
    %1517 = vrot.lane.b32.xlu0 %v1203, 96
    %v1518 = vpop.permute.xlu0 %1517
    %v1521 = vsel %vm207, %v1516, 0
    %1523 = vmatprep.subr.bf16.mxu0 0
    %1524 = vmatpush1.bf16.msra.mxu0 %v1518
    %1525 = vmatprep.subr.bf16.mxu0 0
    %1526 = vmatpush1.bf16.msra.mxu0 0
    %1527 = vmatprep.subr.bf16.mxu0 0
    %1528 = vmatpush1.bf16.msra.mxu0 0
    %1529 = vmatprep.subr.bf16.mxu0 0
    %1530 = vmatpush1.bf16.msra.mxu0 0
    %1531 = vmatprep.subr.bf16.mxu0 0
    %1532 = vmatpush1.bf16.msra.mxu0 0
    %1533 = vmatprep.subr.bf16.mxu0 0
    %1534 = vmatpush1.bf16.msra.mxu0 0
    %1535 = vmatprep.subr.bf16.mxu0 0
    %1536 = vmatpush1.bf16.msra.mxu0 0
    %1537 = vmatprep.subr.bf16.mxu0 0
    %1538 = vmatpush1.bf16.msra.mxu0 0
    %1539 = vmatprep.subr.bf16.mxu0 0
    %1540 = vmatpush1.bf16.msra.mxu0 0
    %1541 = vmatprep.subr.bf16.mxu0 0
    %1542 = vmatpush1.bf16.msra.mxu0 0
    %1543 = vmatprep.subr.bf16.mxu0 0
    %1544 = vmatpush1.bf16.msra.mxu0 0
    %1545 = vmatprep.subr.bf16.mxu0 0
    %1546 = vmatpush1.bf16.msra.mxu0 0
    %1547 = vmatprep.subr.bf16.mxu0 0
    %1548 = vmatpush1.bf16.msra.mxu0 0
    %1549 = vmatprep.subr.bf16.mxu0 0
    %1550 = vmatpush1.bf16.msra.mxu0 0
    %1551 = vmatprep.subr.bf16.mxu0 0
    %1552 = vmatpush1.bf16.msra.mxu0 0
    %1553 = vmatprep.subr.bf16.mxu0 0
    %1554 = vmatpush1.bf16.msra.mxu0 0
    %1555 = vmatprep.mubr.bf16.mxu0 0
    %1556 = vmatmul.mubr.bf16.gmra.mrb[0].mxu0 %v1521
    %v1557 = vpop.f32.mrb[0].mxu0
    %v1558 = vadd.f32 0.0, %v1557
    %v1559 = vpop.f32.mrb[0].mxu0
    %v1560 = vpop.f32.mrb[0].mxu0
    %v1561 = vadd.f32 0.0, %v1560
    %v1562 = vpop.f32.mrb[0].mxu0
    %1563 = vdwg.mxu0
    %1564 = vrot.lane.b32.xlu0 %v1202, 80
    %v1565 = vpop.permute.xlu0 %1564
    %1566 = vrot.lane.b32.xlu0 %v1202, 16
    %v1567 = vpop.permute.xlu0 %1566
    %v1569 = vsel %vm207, %v1565, 0
    %v1572 = vsel %vm207, %v1567, 0
    %1574 = vmatprep.subr.bf16.mxu0 0
    %1575 = vmatpush1.bf16.xpose.msra.mxu0 %v1572
    %1576 = vmatprep.subr.bf16.mxu0 0
    %1577 = vmatpush1.bf16.xpose.msra.mxu0 0
    %1578 = vmatprep.subr.bf16.mxu0 0
    %1579 = vmatpush1.bf16.xpose.msra.mxu0 0
    %1580 = vmatprep.subr.bf16.mxu0 0
    %1581 = vmatpush1.bf16.xpose.msra.mxu0 0
    %1582 = vmatprep.subr.bf16.mxu0 0
    %1583 = vmatpush1.bf16.xpose.msra.mxu0 0
    %1584 = vmatprep.subr.bf16.mxu0 0
    %1585 = vmatpush1.bf16.xpose.msra.mxu0 0
    %1586 = vmatprep.subr.bf16.mxu0 0
    %1587 = vmatpush1.bf16.xpose.msra.mxu0 0
    %1588 = vmatprep.subr.bf16.mxu0 0
    %1589 = vmatpush1.bf16.xpose.msra.mxu0 0
    %1590 = vmatprep.subr.bf16.mxu0 0
    %1591 = vmatpush1.bf16.xpose.msra.mxu0 0
    %1592 = vmatprep.subr.bf16.mxu0 0
    %1593 = vmatpush1.bf16.xpose.msra.mxu0 0
    %1594 = vmatprep.subr.bf16.mxu0 0
    %1595 = vmatpush1.bf16.xpose.msra.mxu0 0
    %1596 = vmatprep.subr.bf16.mxu0 0
    %1597 = vmatpush1.bf16.xpose.msra.mxu0 0
    %1598 = vmatprep.subr.bf16.mxu0 0
    %1599 = vmatpush1.bf16.xpose.msra.mxu0 0
    %1600 = vmatprep.subr.bf16.mxu0 0
    %1601 = vmatpush1.bf16.xpose.msra.mxu0 0
    %1602 = vmatprep.subr.bf16.mxu0 0
    %1603 = vmatpush1.bf16.xpose.msra.mxu0 0
    %1604 = vmatprep.subr.bf16.mxu0 0
    %1605 = vmatpush1.bf16.xpose.msra.mxu0 0
    %1606 = vmatprep.mubr.bf16.mxu0 0
    %1607 = vmatmul.mubr.bf16.gmra.mrb[0].mxu0 %v1569
    %v1608 = vpop.f32.mrb[0].mxu0
    %v1609 = vadd.f32 %v92, %v1608
    %v1610 = vpop.f32.mrb[0].mxu0
    %v1611 = vpop.f32.mrb[0].mxu0
    %v1612 = vadd.f32 %v93, %v1611
    %v1613 = vpop.f32.mrb[0].mxu0
    %1614 = vdwg.mxu0
    %v1615 = vsel %vm207, %v1609, -inf
    %1616 = vmax.xlane.f32.xlu0 %v1615
    %v1617 = vpop.xlane.xlu0 %1616
    %v1618 = vsel %vm207, %v1612, -inf
    %1619 = vmax.xlane.f32.xlu0 %v1618
    %v1620 = vpop.xlane.xlu0 %1619
    %v1621 = vsub.f32 %v1609, %v1617
    %v1622 = vsub.f32 %v1612, %v1620
    %v1623 = vmul.f32 %v1621, 1.442695
    %v1624 = vpow.pop %v1623
    %v1625 = vmul.f32 %v1622, 1.442695
    %v1626 = vpow.pop %v1625
    %v1627 = vsel %vm207, %v1624, 0.0
    %1628 = vadd.xlane.f32.xlu0 %v1627
    %v1629 = vpop.xlane.xlu0 %1628
    %v1630 = vsel %vm207, %v1626, 0.0
    %1631 = vadd.xlane.f32.xlu0 %v1630
    %v1632 = vpop.xlane.xlu0 %1631
    %v1633 = vrcp.pop %v1629
    %v1634 = vrcp.pop %v1632
    %v1635 = vmul.f32 %v1624, %v1633
    %v1636 = vmul.f32 %v1626, %v1634
    %v1637 = vpack.c.bf16 %v1636, %v1635
    %1638 = vrot.lane.b32.xlu0 %v1203, 80
    %v1639 = vpop.permute.xlu0 %1638
    %v1642 = vsel %vm207, %v1637, 0
    %1644 = vmatprep.subr.bf16.mxu0 0
    %1645 = vmatpush1.bf16.msra.mxu0 %v1639
    %1646 = vmatprep.subr.bf16.mxu0 0
    %1647 = vmatpush1.bf16.msra.mxu0 0
    %1648 = vmatprep.subr.bf16.mxu0 0
    %1649 = vmatpush1.bf16.msra.mxu0 0
    %1650 = vmatprep.subr.bf16.mxu0 0
    %1651 = vmatpush1.bf16.msra.mxu0 0
    %1652 = vmatprep.subr.bf16.mxu0 0
    %1653 = vmatpush1.bf16.msra.mxu0 0
    %1654 = vmatprep.subr.bf16.mxu0 0
    %1655 = vmatpush1.bf16.msra.mxu0 0
    %1656 = vmatprep.subr.bf16.mxu0 0
    %1657 = vmatpush1.bf16.msra.mxu0 0
    %1658 = vmatprep.subr.bf16.mxu0 0
    %1659 = vmatpush1.bf16.msra.mxu0 0
    %1660 = vmatprep.subr.bf16.mxu0 0
    %1661 = vmatpush1.bf16.msra.mxu0 0
    %1662 = vmatprep.subr.bf16.mxu0 0
    %1663 = vmatpush1.bf16.msra.mxu0 0
    %1664 = vmatprep.subr.bf16.mxu0 0
    %1665 = vmatpush1.bf16.msra.mxu0 0
    %1666 = vmatprep.subr.bf16.mxu0 0
    %1667 = vmatpush1.bf16.msra.mxu0 0
    %1668 = vmatprep.subr.bf16.mxu0 0
    %1669 = vmatpush1.bf16.msra.mxu0 0
    %1670 = vmatprep.subr.bf16.mxu0 0
    %1671 = vmatpush1.bf16.msra.mxu0 0
    %1672 = vmatprep.subr.bf16.mxu0 0
    %1673 = vmatpush1.bf16.msra.mxu0 0
    %1674 = vmatprep.subr.bf16.mxu0 0
    %1675 = vmatpush1.bf16.msra.mxu0 0
    %1676 = vmatprep.mubr.bf16.mxu0 0
    %1677 = vmatmul.mubr.bf16.gmra.mrb[0].mxu0 %v1642
    %v1678 = vpop.f32.mrb[0].mxu0
    %v1679 = vadd.f32 0.0, %v1678
    %v1680 = vpop.f32.mrb[0].mxu0
    %v1681 = vpop.f32.mrb[0].mxu0
    %v1682 = vadd.f32 0.0, %v1681
    %v1683 = vpop.f32.mrb[0].mxu0
    %1684 = vdwg.mxu0
    %1687 = vrot.lane.b32.xlu0 %v1437, 16
    %v1688 = vpop.permute.xlu0 %1687
    %1689 = vrot.lane.b32.xlu0 %v1440, 16
    %v1690 = vpop.permute.xlu0 %1689
    %1695 = vrot.lane.b32.xlu0 %v1558, 32
    %v1696 = vpop.permute.xlu0 %1695
    %1697 = vrot.lane.b32.xlu0 %v1561, 32
    %v1698 = vpop.permute.xlu0 %1697
    %1703 = vrot.lane.b32.xlu0 %v1679, 48
    %v1704 = vpop.permute.xlu0 %1703
    %1705 = vrot.lane.b32.xlu0 %v1682, 48
    %v1706 = vpop.permute.xlu0 %1705
    %v1709 = vsel %vm207, %v1315, %v1688
    %v1710 = vsel %vm207, %v1318, %v1690
    %v1711 = vsel %vm712, %v1709, %v1696
    %v1712 = vsel %vm712, %v1710, %v1698
    %v1713 = vsel %vm715, %v1711, %v1704
    %v1714 = vsel %vm715, %v1712, %v1706
    %v1715 = vpack.c.bf16 %v1714, %v1713
    %s1716 = scalar_lea.vmem %s5, 32
    %v1717 = vld [vmem:[%s1716] sm:$0xf]
    %v1718 = vld [vmem:[%s1716 + $0x4] sm:$0xf]
    %v1719 = vld [vmem:[%s1716 + $0x8] sm:$0xf]
    %v1720 = vld [vmem:[%s1716 + $0xc] sm:$0xf]
    %v1721 = vld [vmem:[%s1716 + $0x10] sm:$0xf]
    %v1722 = vld [vmem:[%s1716 + $0x14] sm:$0xf]
    %v1723 = vld [vmem:[%s1716 + $0x18] sm:$0xf]
    %v1724 = vld [vmem:[%s1716 + $0x1c] sm:$0xf]
    %v1725 = vlaneseq
    %v1726 = vshrl.u32 %v1725, 7
    %v1727 = vsub.s32 0, %v1726
    %v1728 = vrot.slane %v1092, %v1727
    %v1737 = vunpack.c.l.b16 %v1717
    %v1738 = vunpack.c.l.b16 %v1718
    %v1739 = vunpack.c.l.b16 %v1719
    %v1740 = vunpack.c.l.b16 %v1720
    %v1741 = vunpack.c.l.b16 %v1721
    %v1742 = vunpack.c.l.b16 %v1722
    %v1743 = vunpack.c.l.b16 %v1723
    %v1744 = vunpack.c.l.b16 %v1724
    %v1745 = vpack.c.b16 %v1738, %v1737
    %v1746 = vpack.c.b16 %v1740, %v1739
    %v1747 = vpack.c.b16 %v1742, %v1741
    %v1748 = vpack.c.b16 %v1744, %v1743
    %v1754 = vsel %vm52, %v1715, 0
    %1756 = vmatprep.subr.bf16.mxu0 0
    %1757 = vmatpush1.bf16.msra.mxu0 %v1745
    %1758 = vmatprep.subr.bf16.mxu0 0
    %1759 = vmatpush1.bf16.msra.mxu0 %v1746
    %1760 = vmatprep.subr.bf16.mxu0 0
    %1761 = vmatpush1.bf16.msra.mxu0 %v1747
    %1762 = vmatprep.subr.bf16.mxu0 0
    %1763 = vmatpush1.bf16.msra.mxu0 %v1748
    %1764 = vmatprep.subr.bf16.mxu0 0
    %1765 = vmatpush1.bf16.msra.mxu0 0
    %1766 = vmatprep.subr.bf16.mxu0 0
    %1767 = vmatpush1.bf16.msra.mxu0 0
    %1768 = vmatprep.subr.bf16.mxu0 0
    %1769 = vmatpush1.bf16.msra.mxu0 0
    %1770 = vmatprep.subr.bf16.mxu0 0
    %1771 = vmatpush1.bf16.msra.mxu0 0
    %1772 = vmatprep.subr.bf16.mxu0 0
    %1773 = vmatpush1.bf16.msra.mxu0 0
    %1774 = vmatprep.subr.bf16.mxu0 0
    %1775 = vmatpush1.bf16.msra.mxu0 0
    %1776 = vmatprep.subr.bf16.mxu0 0
    %1777 = vmatpush1.bf16.msra.mxu0 0
    %1778 = vmatprep.subr.bf16.mxu0 0
    %1779 = vmatpush1.bf16.msra.mxu0 0
    %1780 = vmatprep.subr.bf16.mxu0 0
    %1781 = vmatpush1.bf16.msra.mxu0 0
    %1782 = vmatprep.subr.bf16.mxu0 0
    %1783 = vmatpush1.bf16.msra.mxu0 0
    %1784 = vmatprep.subr.bf16.mxu0 0
    %1785 = vmatpush1.bf16.msra.mxu0 0
    %1786 = vmatprep.subr.bf16.mxu0 0
    %1787 = vmatpush1.bf16.msra.mxu0 0
    %1788 = vmatprep.mubr.bf16.mxu0 0
    %1789 = vmatmul.mubr.bf16.gmra.mrb[0].mxu0 %v1754
    %v1790 = vpop.f32.mrb[0].mxu0
    %v1791 = vadd.f32 %v1728, %v1790
    %v1792 = vpop.f32.mrb[0].mxu0
    %v1793 = vpop.f32.mrb[0].mxu0
    %v1794 = vadd.f32 %v1728, %v1793
    %v1795 = vpop.f32.mrb[0].mxu0
    %1796 = vdwg.mxu0
    %v1797 = vadd.f32 %v1791, %v1089
    %v1798 = vadd.f32 %v1794, %v1090
    %v1799 = vsel %vm52, %v1797, 0.0
    %1800 = vadd.xlane.f32.xlu0 %v1799
    %v1801 = vpop.xlane.xlu0 %1800
    %v1802 = vsel %vm52, %v1798, 0.0
    %1803 = vadd.xlane.f32.xlu0 %v1802
    %v1804 = vpop.xlane.xlu0 %1803
    %v1805 = vmul.f32 %v1801, %v59
    %v1806 = vmul.f32 %v1804, %v59
    %v1807 = vsub.f32 %v1797, %v1805
    %v1808 = vsub.f32 %v1798, %v1806
    %v1809 = vmul.f32 %v1807, %v1807
    %v1810 = vmul.f32 %v1808, %v1808
    %v1811 = vsel %vm52, %v1809, 0.0
    %1812 = vadd.xlane.f32.xlu0 %v1811
    %v1813 = vpop.xlane.xlu0 %1812
    %v1814 = vsel %vm52, %v1810, 0.0
    %1815 = vadd.xlane.f32.xlu0 %v1814
    %v1816 = vpop.xlane.xlu0 %1815
    %v1817 = vmul.f32 %v1813, %v59
    %v1818 = vmul.f32 %v1816, %v59
    %v1819 = vadd.f32 %v1817, 1e-12
    %v1820 = vadd.f32 %v1818, 1e-12
    %v1821 = vrsqrt.pop %v1819
    %v1822 = vrsqrt.pop %v1820
    %v1823 = vmul.f32 %v1807, %v1821
    %v1824 = vmul.f32 %v1808, %v1822
    %v1825 = vlaneseq
    %v1826 = vshrl.u32 %v1825, 7
    %v1827 = vsub.s32 1, %v1826
    %v1828 = vrot.slane %v1092, %v1827
    %v1829 = vmul.f32 %v1823, %v1828
    %v1830 = vmul.f32 %v1824, %v1828
    %v1831 = vlaneseq
    %v1832 = vshrl.u32 %v1831, 7
    %v1833 = vsub.s32 2, %v1832
    %v1834 = vrot.slane %v1092, %v1833
    %v1835 = vadd.f32 %v1829, %v1834
    %v1836 = vadd.f32 %v1830, %v1834
    %v1837 = vpack.c.bf16 %v1836, %v1835
    %s1838 = scalar_lea.vmem %s6, 32
    %v1839 = vld [vmem:[%s1838] sm:$0xf]
    %v1840 = vld [vmem:[%s1838 + $0x4] sm:$0xf]
    %v1841 = vld [vmem:[%s1838 + $0x8] sm:$0xf]
    %v1842 = vld [vmem:[%s1838 + $0xc] sm:$0xf]
    %v1843 = vld [vmem:[%s1838 + $0x10] sm:$0xf]
    %v1844 = vld [vmem:[%s1838 + $0x14] sm:$0xf]
    %v1845 = vld [vmem:[%s1838 + $0x18] sm:$0xf]
    %v1846 = vld [vmem:[%s1838 + $0x1c] sm:$0xf]
    %s1847 = scalar_lea.vmem %s7, 1
    %v1848 = vld [vmem:[%s1847] sm:$0x1]
    %v1850 = vlaneseq
    %v1851 = vshrl.u32 %v1850, 7
    %v1852 = vsub.s32 0, %v1851
    %v1853 = vrot.slane %v1848, %v1852
    %v1863 = vunpack.c.l.b16 %v1839
    %v1864 = vunpack.c.l.b16 %v1840
    %v1865 = vunpack.c.l.b16 %v1841
    %v1866 = vunpack.c.l.b16 %v1842
    %v1867 = vunpack.c.l.b16 %v1843
    %v1868 = vunpack.c.l.b16 %v1844
    %v1869 = vunpack.c.l.b16 %v1845
    %v1870 = vunpack.c.l.b16 %v1846
    %v1871 = vpack.c.b16 %v1864, %v1863
    %v1872 = vpack.c.b16 %v1866, %v1865
    %v1873 = vpack.c.b16 %v1868, %v1867
    %v1874 = vpack.c.b16 %v1870, %v1869
    %v1880 = vsel %vm52, %v1837, 0
    %1882 = vmatprep.subr.bf16.mxu0 0
    %1883 = vmatpush1.bf16.msra.mxu0 %v1871
    %1884 = vmatprep.subr.bf16.mxu0 0
    %1885 = vmatpush1.bf16.msra.mxu0 %v1872
    %1886 = vmatprep.subr.bf16.mxu0 0
    %1887 = vmatpush1.bf16.msra.mxu0 %v1873
    %1888 = vmatprep.subr.bf16.mxu0 0
    %1889 = vmatpush1.bf16.msra.mxu0 %v1874
    %1890 = vmatprep.subr.bf16.mxu0 0
    %1891 = vmatpush1.bf16.msra.mxu0 0
    %1892 = vmatprep.subr.bf16.mxu0 0
    %1893 = vmatpush1.bf16.msra.mxu0 0
    %1894 = vmatprep.subr.bf16.mxu0 0
    %1895 = vmatpush1.bf16.msra.mxu0 0
    %1896 = vmatprep.subr.bf16.mxu0 0
    %1897 = vmatpush1.bf16.msra.mxu0 0
    %1898 = vmatprep.subr.bf16.mxu0 0
    %1899 = vmatpush1.bf16.msra.mxu0 0
    %1900 = vmatprep.subr.bf16.mxu0 0
    %1901 = vmatpush1.bf16.msra.mxu0 0
    %1902 = vmatprep.subr.bf16.mxu0 0
    %1903 = vmatpush1.bf16.msra.mxu0 0
    %1904 = vmatprep.subr.bf16.mxu0 0
    %1905 = vmatpush1.bf16.msra.mxu0 0
    %1906 = vmatprep.subr.bf16.mxu0 0
    %1907 = vmatpush1.bf16.msra.mxu0 0
    %1908 = vmatprep.subr.bf16.mxu0 0
    %1909 = vmatpush1.bf16.msra.mxu0 0
    %1910 = vmatprep.subr.bf16.mxu0 0
    %1911 = vmatpush1.bf16.msra.mxu0 0
    %1912 = vmatprep.subr.bf16.mxu0 0
    %1913 = vmatpush1.bf16.msra.mxu0 0
    %1914 = vmatprep.mubr.bf16.mxu0 0
    %1915 = vmatmul.mubr.bf16.gmra.mrb[0].mxu0 %v1880
    %v1916 = vpop.f32.mrb[0].mxu0
    %v1917 = vadd.f32 %v1853, %v1916
    %v1918 = vpop.f32.mrb[0].mxu0
    %v1919 = vpop.f32.mrb[0].mxu0
    %v1920 = vadd.f32 %v1853, %v1919
    %v1921 = vpop.f32.mrb[0].mxu0
    %1922 = vdwg.mxu0
    %v1923 = vmul.f32 %v1917, %v1917
    %v1924 = vmul.f32 %v1920, %v1920
    %v1925 = vmul.f32 %v1917, %v1923
    %v1926 = vmul.f32 %v1920, %v1924
    %v1927 = vmul.f32 %v1925, 0.044715
    %v1928 = vmul.f32 %v1926, 0.044715
    %v1929 = vadd.f32 %v1917, %v1927
    %v1930 = vadd.f32 %v1920, %v1928
    %v1931 = vmul.f32 %v1929, 0.7978846
    %v1932 = vmul.f32 %v1930, 0.7978846
    %v1933 = vtanh.pop %v1931
    %v1934 = vtanh.pop %v1932
    %v1935 = vadd.f32 %v1933, 1.0
    %v1936 = vadd.f32 %v1934, 1.0
    %v1937 = vmul.f32 %v1935, 0.5
    %v1938 = vmul.f32 %v1936, 0.5
    %v1939 = vmul.f32 %v1917, %v1937
    %v1940 = vmul.f32 %v1920, %v1938
    %v1941 = vpack.c.bf16 %v1940, %v1939
    %s1942 = scalar_lea.vmem %s8, 64
    %v1943 = vld [vmem:[%s1942] sm:$0xf]
    %v1944 = vld [vmem:[%s1942 + $0x4] sm:$0xf]
    %v1945 = vld [vmem:[%s1942 + $0x8] sm:$0xf]
    %v1946 = vld [vmem:[%s1942 + $0xc] sm:$0xf]
    %v1947 = vld [vmem:[%s1942 + $0x10] sm:$0xf]
    %v1948 = vld [vmem:[%s1942 + $0x14] sm:$0xf]
    %v1949 = vld [vmem:[%s1942 + $0x18] sm:$0xf]
    %v1950 = vld [vmem:[%s1942 + $0x1c] sm:$0xf]
    %v1951 = vld [vmem:[%s1942 + $0x20] sm:$0xf]
    %v1952 = vld [vmem:[%s1942 + $0x24] sm:$0xf]
    %v1953 = vld [vmem:[%s1942 + $0x28] sm:$0xf]
    %v1954 = vld [vmem:[%s1942 + $0x2c] sm:$0xf]
    %v1955 = vld [vmem:[%s1942 + $0x30] sm:$0xf]
    %v1956 = vld [vmem:[%s1942 + $0x34] sm:$0xf]
    %v1957 = vld [vmem:[%s1942 + $0x38] sm:$0xf]
    %v1958 = vld [vmem:[%s1942 + $0x3c] sm:$0xf]
    %v1959 = vlaneseq
    %v1960 = vshrl.u32 %v1959, 7
    %v1961 = vsub.s32 3, %v1960
    %v1962 = vrot.slane %v1092, %v1961
    %v1979 = vunpack.c.l.b16 %v1943
    %v1980 = vunpack.c.l.b16 %v1944
    %v1981 = vunpack.c.l.b16 %v1945
    %v1982 = vunpack.c.l.b16 %v1946
    %v1983 = vunpack.c.l.b16 %v1947
    %v1984 = vunpack.c.l.b16 %v1948
    %v1985 = vunpack.c.l.b16 %v1949
    %v1986 = vunpack.c.l.b16 %v1950
    %v1987 = vunpack.c.l.b16 %v1951
    %v1988 = vunpack.c.l.b16 %v1952
    %v1989 = vunpack.c.l.b16 %v1953
    %v1990 = vunpack.c.l.b16 %v1954
    %v1991 = vunpack.c.l.b16 %v1955
    %v1992 = vunpack.c.l.b16 %v1956
    %v1993 = vunpack.c.l.b16 %v1957
    %v1994 = vunpack.c.l.b16 %v1958
    %v1995 = vpack.c.b16 %v1980, %v1979
    %v1996 = vpack.c.b16 %v1982, %v1981
    %v1997 = vpack.c.b16 %v1984, %v1983
    %v1998 = vpack.c.b16 %v1986, %v1985
    %v1999 = vpack.c.b16 %v1988, %v1987
    %v2000 = vpack.c.b16 %v1990, %v1989
    %v2001 = vpack.c.b16 %v1992, %v1991
    %v2002 = vpack.c.b16 %v1994, %v1993
    %2011 = vmatprep.subr.bf16.mxu0 0
    %2012 = vmatpush1.bf16.msra.mxu0 %v1995
    %2013 = vmatprep.subr.bf16.mxu0 0
    %2014 = vmatpush1.bf16.msra.mxu0 %v1996
    %2015 = vmatprep.subr.bf16.mxu0 0
    %2016 = vmatpush1.bf16.msra.mxu0 %v1997
    %2017 = vmatprep.subr.bf16.mxu0 0
    %2018 = vmatpush1.bf16.msra.mxu0 %v1998
    %2019 = vmatprep.subr.bf16.mxu0 0
    %2020 = vmatpush1.bf16.msra.mxu0 %v1999
    %2021 = vmatprep.subr.bf16.mxu0 0
    %2022 = vmatpush1.bf16.msra.mxu0 %v2000
    %2023 = vmatprep.subr.bf16.mxu0 0
    %2024 = vmatpush1.bf16.msra.mxu0 %v2001
    %2025 = vmatprep.subr.bf16.mxu0 0
    %2026 = vmatpush1.bf16.msra.mxu0 %v2002
    %2027 = vmatprep.subr.bf16.mxu0 0
    %2028 = vmatpush1.bf16.msra.mxu0 0
    %2029 = vmatprep.subr.bf16.mxu0 0
    %2030 = vmatpush1.bf16.msra.mxu0 0
    %2031 = vmatprep.subr.bf16.mxu0 0
    %2032 = vmatpush1.bf16.msra.mxu0 0
    %2033 = vmatprep.subr.bf16.mxu0 0
    %2034 = vmatpush1.bf16.msra.mxu0 0
    %2035 = vmatprep.subr.bf16.mxu0 0
    %2036 = vmatpush1.bf16.msra.mxu0 0
    %2037 = vmatprep.subr.bf16.mxu0 0
    %2038 = vmatpush1.bf16.msra.mxu0 0
    %2039 = vmatprep.subr.bf16.mxu0 0
    %2040 = vmatpush1.bf16.msra.mxu0 0
    %2041 = vmatprep.subr.bf16.mxu0 0
    %2042 = vmatpush1.bf16.msra.mxu0 0
    %2043 = vmatprep.mubr.bf16.mxu0 0
    %2044 = vmatmul.mubr.bf16.gmra.mrb[0].mxu0 %v1941
    %v2045 = vpop.f32.mrb[0].mxu0
    %v2046 = vadd.f32 %v1962, %v2045
    %v2047 = vpop.f32.mrb[0].mxu0
    %v2048 = vpop.f32.mrb[0].mxu0
    %v2049 = vadd.f32 %v1962, %v2048
    %v2050 = vpop.f32.mrb[0].mxu0
    %2051 = vdwg.mxu0
    %v2052 = vadd.f32 %v2046, %v1835
    %v2053 = vadd.f32 %v2049, %v1836
    %v2054 = vsel %vm52, %v2052, 0.0
    %2055 = vadd.xlane.f32.xlu0 %v2054
    %v2056 = vpop.xlane.xlu0 %2055
    %v2057 = vsel %vm52, %v2053, 0.0
    %2058 = vadd.xlane.f32.xlu0 %v2057
    %v2059 = vpop.xlane.xlu0 %2058
    %v2060 = vmul.f32 %v2056, %v59
    %v2061 = vmul.f32 %v2059, %v59
    %v2062 = vsub.f32 %v2052, %v2060
    %v2063 = vsub.f32 %v2053, %v2061
    %v2064 = vmul.f32 %v2062, %v2062
    %v2065 = vmul.f32 %v2063, %v2063
    %v2066 = vsel %vm52, %v2064, 0.0
    %2067 = vadd.xlane.f32.xlu0 %v2066
    %v2068 = vpop.xlane.xlu0 %2067
    %v2069 = vsel %vm52, %v2065, 0.0
    %2070 = vadd.xlane.f32.xlu0 %v2069
    %v2071 = vpop.xlane.xlu0 %2070
    %v2072 = vmul.f32 %v2068, %v59
    %v2073 = vmul.f32 %v2071, %v59
    %v2074 = vadd.f32 %v2072, 1e-12
    %v2075 = vadd.f32 %v2073, 1e-12
    %v2076 = vrsqrt.pop %v2074
    %v2077 = vrsqrt.pop %v2075
    %v2078 = vmul.f32 %v2062, %v2076
    %v2079 = vmul.f32 %v2063, %v2077
    %v2080 = vlaneseq
    %v2081 = vshrl.u32 %v2080, 7
    %v2082 = vsub.s32 4, %v2081
    %v2083 = vrot.slane %v1092, %v2082
    %v2084 = vmul.f32 %v2078, %v2083
    %v2085 = vmul.f32 %v2079, %v2083
    %v2086 = vlaneseq
    %v2087 = vshrl.u32 %v2086, 7
    %v2088 = vsub.s32 5, %v2087
    %v2089 = vrot.slane %v1092, %v2088
    %v2090 = vadd.f32 %v2084, %v2089
    %v2091 = vadd.f32 %v2085, %v2089
    %v2093 = vrot.slane %v2091, 7
    %vm2095 = vcmask 1040384
    %v2096 = vsel %vm2095, %v2090, %v2093
    %v2097 = vpack.c.bf16 %v2096, %v2096
    %v2098 = vld [vmem:[%s10] sm:$0xf]
    %v2099 = vld [vmem:[%s10 + $0x4] sm:$0xf]
    %v2100 = vld [vmem:[%s10 + $0x8] sm:$0xf]
    %v2101 = vld [vmem:[%s10 + $0xc] sm:$0xf]
    %v2102 = vld [vmem:[%s10 + $0x10] sm:$0xf]
    %v2103 = vld [vmem:[%s10 + $0x14] sm:$0xf]
    %v2104 = vld [vmem:[%s10 + $0x18] sm:$0xf]
    %v2105 = vld [vmem:[%s10 + $0x1c] sm:$0xf]
    %v2106 = vld [vmem:[%s11] sm:$0x1]
    %v2108 = vlaneseq
    %v2109 = vshrl.u32 %v2108, 7
    %v2110 = vsub.s32 0, %v2109
    %v2111 = vrot.slane %v2106, %v2110
    %v2121 = vunpack.c.l.b16 %v2098
    %v2122 = vunpack.c.l.b16 %v2099
    %v2123 = vunpack.c.l.b16 %v2100
    %v2124 = vunpack.c.l.b16 %v2101
    %v2125 = vunpack.c.l.b16 %v2102
    %v2126 = vunpack.c.l.b16 %v2103
    %v2127 = vunpack.c.l.b16 %v2104
    %v2128 = vunpack.c.l.b16 %v2105
    %v2129 = vpack.c.b16 %v2122, %v2121
    %v2130 = vpack.c.b16 %v2124, %v2123
    %v2131 = vpack.c.b16 %v2126, %v2125
    %v2132 = vpack.c.b16 %v2128, %v2127
    %v2138 = vsel %vm52, %v2097, 0
    %2140 = vmatprep.subr.bf16.mxu0 0
    %2141 = vmatpush1.bf16.msra.mxu0 %v2129
    %2142 = vmatprep.subr.bf16.mxu0 0
    %2143 = vmatpush1.bf16.msra.mxu0 %v2130
    %2144 = vmatprep.subr.bf16.mxu0 0
    %2145 = vmatpush1.bf16.msra.mxu0 %v2131
    %2146 = vmatprep.subr.bf16.mxu0 0
    %2147 = vmatpush1.bf16.msra.mxu0 %v2132
    %2148 = vmatprep.subr.bf16.mxu0 0
    %2149 = vmatpush1.bf16.msra.mxu0 0
    %2150 = vmatprep.subr.bf16.mxu0 0
    %2151 = vmatpush1.bf16.msra.mxu0 0
    %2152 = vmatprep.subr.bf16.mxu0 0
    %2153 = vmatpush1.bf16.msra.mxu0 0
    %2154 = vmatprep.subr.bf16.mxu0 0
    %2155 = vmatpush1.bf16.msra.mxu0 0
    %2156 = vmatprep.subr.bf16.mxu0 0
    %2157 = vmatpush1.bf16.msra.mxu0 0
    %2158 = vmatprep.subr.bf16.mxu0 0
    %2159 = vmatpush1.bf16.msra.mxu0 0
    %2160 = vmatprep.subr.bf16.mxu0 0
    %2161 = vmatpush1.bf16.msra.mxu0 0
    %2162 = vmatprep.subr.bf16.mxu0 0
    %2163 = vmatpush1.bf16.msra.mxu0 0
    %2164 = vmatprep.subr.bf16.mxu0 0
    %2165 = vmatpush1.bf16.msra.mxu0 0
    %2166 = vmatprep.subr.bf16.mxu0 0
    %2167 = vmatpush1.bf16.msra.mxu0 0
    %2168 = vmatprep.subr.bf16.mxu0 0
    %2169 = vmatpush1.bf16.msra.mxu0 0
    %2170 = vmatprep.subr.bf16.mxu0 0
    %2171 = vmatpush1.bf16.msra.mxu0 0
    %2172 = vmatprep.mubr.bf16.mxu0 0
    %2173 = vmatmul.mubr.bf16.gmra.mrb[0].mxu0 %v2138
    %v2174 = vpop.f32.mrb[0].mxu0
    %v2175 = vadd.f32 %v2111, %v2174
    %v2176 = vpop.f32.mrb[0].mxu0
    %v2177 = vpop.f32.mrb[0].mxu0
    %v2178 = vpop.f32.mrb[0].mxu0
    %2179 = vdwg.mxu0
    %v2180 = vmax.f32 %v2175, 0.0
    %v2181 = vpack.c.bf16 %v2180, %v2180
    %v2182 = vld [vmem:[%s12] sm:$0xf]
    %v2183 = vld [vmem:[%s12 + $0x4] sm:$0xf]
    %v2184 = vld [vmem:[%s12 + $0x8] sm:$0xf]
    %v2185 = vld [vmem:[%s12 + $0xc] sm:$0xf]
    %v2186 = vld [vmem:[%s12 + $0x10] sm:$0xf]
    %v2187 = vld [vmem:[%s12 + $0x14] sm:$0xf]
    %v2188 = vld [vmem:[%s12 + $0x18] sm:$0xf]
    %v2189 = vld [vmem:[%s12 + $0x1c] sm:$0xf]
    %v2190 = vld [vmem:[%s13] sm:$0x1]
    %v2192 = vlaneseq
    %v2193 = vshrl.u32 %v2192, 7
    %v2194 = vsub.s32 0, %v2193
    %v2195 = vrot.slane %v2190, %v2194
    %v2205 = vunpack.c.l.b16 %v2182
    %v2206 = vunpack.c.l.b16 %v2183
    %v2207 = vunpack.c.l.b16 %v2184
    %v2208 = vunpack.c.l.b16 %v2185
    %v2209 = vunpack.c.l.b16 %v2186
    %v2210 = vunpack.c.l.b16 %v2187
    %v2211 = vunpack.c.l.b16 %v2188
    %v2212 = vunpack.c.l.b16 %v2189
    %v2213 = vpack.c.b16 %v2206, %v2205
    %v2214 = vpack.c.b16 %v2208, %v2207
    %v2215 = vpack.c.b16 %v2210, %v2209
    %v2216 = vpack.c.b16 %v2212, %v2211
    %v2222 = vsel %vm52, %v2181, 0
    %2224 = vmatprep.subr.bf16.mxu0 0
    %2225 = vmatpush1.bf16.msra.mxu0 %v2213
    %2226 = vmatprep.subr.bf16.mxu0 0
    %2227 = vmatpush1.bf16.msra.mxu0 %v2214
    %2228 = vmatprep.subr.bf16.mxu0 0
    %2229 = vmatpush1.bf16.msra.mxu0 %v2215
    %2230 = vmatprep.subr.bf16.mxu0 0
    %2231 = vmatpush1.bf16.msra.mxu0 %v2216
    %2232 = vmatprep.subr.bf16.mxu0 0
    %2233 = vmatpush1.bf16.msra.mxu0 0
    %2234 = vmatprep.subr.bf16.mxu0 0
    %2235 = vmatpush1.bf16.msra.mxu0 0
    %2236 = vmatprep.subr.bf16.mxu0 0
    %2237 = vmatpush1.bf16.msra.mxu0 0
    %2238 = vmatprep.subr.bf16.mxu0 0
    %2239 = vmatpush1.bf16.msra.mxu0 0
    %2240 = vmatprep.subr.bf16.mxu0 0
    %2241 = vmatpush1.bf16.msra.mxu0 0
    %2242 = vmatprep.subr.bf16.mxu0 0
    %2243 = vmatpush1.bf16.msra.mxu0 0
    %2244 = vmatprep.subr.bf16.mxu0 0
    %2245 = vmatpush1.bf16.msra.mxu0 0
    %2246 = vmatprep.subr.bf16.mxu0 0
    %2247 = vmatpush1.bf16.msra.mxu0 0
    %2248 = vmatprep.subr.bf16.mxu0 0
    %2249 = vmatpush1.bf16.msra.mxu0 0
    %2250 = vmatprep.subr.bf16.mxu0 0
    %2251 = vmatpush1.bf16.msra.mxu0 0
    %2252 = vmatprep.subr.bf16.mxu0 0
    %2253 = vmatpush1.bf16.msra.mxu0 0
    %2254 = vmatprep.subr.bf16.mxu0 0
    %2255 = vmatpush1.bf16.msra.mxu0 0
    %2256 = vmatprep.mubr.bf16.mxu0 0
    %2257 = vmatmul.mubr.bf16.gmra.mrb[0].mxu0 %v2222
    %v2258 = vpop.f32.mrb[0].mxu0
    %v2259 = vadd.f32 %v2195, %v2258
    %v2260 = vpop.f32.mrb[0].mxu0
    %v2261 = vpop.f32.mrb[0].mxu0
    %v2262 = vpop.f32.mrb[0].mxu0
    %2263 = vdwg.mxu0
    %2264 = vst [vmem:[#allocation2] sm:$0x3] %v2259
    // Predicated region
    $region58: #{distilbert_forward.1} parent=1 // pred_check
      _
    $region59: #{distilbert_forward.1} parent=1 // pred_check_branch
      %2266 = sbr.rel (0) target = $region61
    $region60: #{distilbert_forward.1} parent=1 // pred_region
      %s2268 = ssub.s32 32, 32
      %2269 = vsyncadd [#allocation3], %s2268
      %s2271 = sshll.u32 [#allocation2], 4
      %s2272 = int_to_ptr.vmem [resolvable:$true] %s2271
      %2274 = dma.vmem_to_hbm [thread:$0]  %s2272, 32, %s14, [#allocation3]
    $region61: #{distilbert_forward.1} parent=1 // pred_fallthru
      _
    // Predicated region
    $region62: #{distilbert_forward.1} parent=1 // pred_check
      _
    $region63: #{distilbert_forward.1} parent=1 // pred_check_branch
      %2276 = sbr.rel (0) target = $region65
    $region64: #{distilbert_forward.1} parent=1 // pred_region
      %2277 = dma.done [#allocation3], 32
    $region65: #{distilbert_forward.1} parent=1 // pred_fallthru
      _
    %2278 = vsyncpa [#allocation3], 1

</llo_original>
